<compile_context>
chip_gen: v6e
topology: v6e:2x2x1
jax: 0.10.0
libtpu: 0.0.40
codegen_flags: <defaults>
</compile_context>

<pallas_src>
import jax
import jax.numpy as jnp
from jax.experimental import pallas as pl
from jax.experimental.pallas import tpu as pltpu

# ----------------------------- model dims ---------------------------------
B = 2        # batch
S = 8        # sequence length (power of two; S_LOG2 used for flat batch mask)
S_LOG2 = 3
BS = B * S   # 16 flattened rows
H = 128      # hidden size
F = 256      # MLP hidden size
V = 256      # vocab size
LN_EPS = 1e-5
NEG_INF = -1e9


# ----------------------------- Pallas kernel ------------------------------
def causal_lm_kernel(ids_ref, mask_ref, emb_ref, pos_ref, wqkv_ref, wo_ref,
                     w1_ref, w2_ref, wlm_ref, ln_ref, logits_ref):
    """Whole batch: embed + transformer block + LM head in one invocation."""
    bf16 = jnp.bfloat16
    lnp = ln_ref[...]                     # (8, H) f32: rows 0..2 = beta1, beta2, beta_f

    # ---- fused embedding gather (one-hot MXU matmul) + positional add ----
    ids = ids_ref[...]                    # (BS, 1) int32
    vocab = jax.lax.broadcasted_iota(jnp.int32, (BS, V), 1)
    onehot = (ids == vocab).astype(bf16)  # (BS, V)
    x = jnp.dot(onehot, emb_ref[...], preferred_element_type=jnp.float32)
    x = x + pos_ref[...]                  # (BS, H) f32

    def layer_norm(h, beta):              # gammas folded into downstream weights
        mu = jnp.mean(h, axis=-1, keepdims=True)
        var = jnp.mean((h - mu) * (h - mu), axis=-1, keepdims=True)
        return (h - mu) * jax.lax.rsqrt(var + LN_EPS) + beta

    # ---- self-attention: flat (BS, .) matmuls, block-diag causal mask ----
    h = layer_norm(x, lnp[0:1, :])
    qkv = jnp.dot(h.astype(bf16), wqkv_ref[...],
                  preferred_element_type=jnp.float32)           # (BS, 3H)
    q = qkv[:, 0:H]
    k = qkv[:, H:2 * H]
    v = qkv[:, 2 * H:3 * H]

    s = jax.lax.dot_general(q.astype(bf16), k.astype(bf16),
                            dimension_numbers=(((1,), (1,)), ((), ())),
                            preferred_element_type=jnp.float32)  # (BS, BS)

    # block-diagonal (same batch) AND causal AND key-not-padded, single select
    row = jax.lax.broadcasted_iota(jnp.int32, (BS, BS), 0)
    col = jax.lax.broadcasted_iota(jnp.int32, (BS, BS), 1)
    same_batch = (row >> S_LOG2) == (col >> S_LOG2)
    causal = col <= row                   # equivalent to per-batch causal when same_batch
    key_ok = mask_ref[...] > 0.5          # (1, BS) broadcast over query rows
    keep = jnp.logical_and(jnp.logical_and(same_batch, causal), key_ok)
    s = jnp.where(keep, s, NEG_INF)

    m = jnp.max(s, axis=-1, keepdims=True)
    p = jnp.exp(s - m)
    denom = jnp.sum(p, axis=-1, keepdims=True)
    p = p * pl.reciprocal(denom, approx=True)                    # EUP slot

    a = jnp.dot(p.astype(bf16), v.astype(bf16),
                preferred_element_type=jnp.float32)              # (BS, H)
    attn = jnp.dot(a.astype(bf16), wo_ref[...],
                   preferred_element_type=jnp.float32)           # (BS, H)
    x1 = x + attn

    # ---- MLP ----
    h2 = layer_norm(x1, lnp[1:2, :])
    mlp = jnp.dot(h2.astype(bf16), w1_ref[...],
                  preferred_element_type=jnp.float32)
    mlp = jnp.maximum(mlp, 0.0)
    mlp = jnp.dot(mlp.astype(bf16), w2_ref[...],
                  preferred_element_type=jnp.float32)
    x2 = x1 + mlp

    # ---- final LN + LM head, flat lane-dense (BS, V) store ----
    hf = layer_norm(x2, lnp[2:3, :])
    logits_ref[...] = jnp.dot(hf.astype(bf16), wlm_ref[...],
                              preferred_element_type=jnp.float32)


# ----------------------------- params --------------------------------------
def init_params(key):
    ks = jax.random.split(key, 9)
    scale = 0.02
    f32 = jnp.float32

    # LayerNorm params: gammas (=1) are folded into the downstream weights,
    # betas (=0) packed into one (8, H) array, rows 0..2 used.
    g1 = jnp.ones((H,), f32)
    g2 = jnp.ones((H,), f32)
    gf = jnp.ones((H,), f32)
    ln = jnp.zeros((8, H), f32)           # rows 0,1,2 = beta1, beta2, beta_f

    wq = scale * jax.random.normal(ks[2], (H, H), f32)
    wq = wq / jnp.sqrt(jnp.float32(H))    # fold 1/sqrt(H) attention scale
    wk = scale * jax.random.normal(ks[3], (H, H), f32)
    wv = scale * jax.random.normal(ks[4], (H, H), f32)
    wqkv = jnp.concatenate([wq, wk, wv], axis=1)          # (H, 3H)

    pos = scale * jax.random.normal(ks[1], (S, H), f32)
    pos_tiled = jnp.tile(pos, (B, 1))                     # pre-tiled (BS, H)

    return {
        "emb": (scale * jax.random.normal(ks[0], (V, H), f32)).astype(jnp.bfloat16),
        "pos": pos_tiled,                                                   # f32
        "wqkv": (g1[:, None] * wqkv).astype(jnp.bfloat16),                  # g1 folded
        "wo":  (scale * jax.random.normal(ks[5], (H, H), f32)).astype(jnp.bfloat16),
        "w1":  (g2[:, None] * scale * jax.random.normal(ks[6], (H, F), f32)
                ).astype(jnp.bfloat16),                                     # g2 folded
        "w2":  (scale * jax.random.normal(ks[7], (F, H), f32)).astype(jnp.bfloat16),
        "wlm": (gf[:, None] * scale * jax.random.normal(ks[8], (H, V), f32)
                ).astype(jnp.bfloat16),                                     # gf folded
        "ln": ln,
    }


# ----------------------------- wrapper --------------------------------------
@jax.jit
def forward_pallas(input_ids, attention_mask, params):
    ids = input_ids.reshape(BS, 1).astype(jnp.int32)
    if attention_mask is None:
        mask = jnp.ones((1, BS), jnp.float32)
    else:
        mask = attention_mask.reshape(1, BS).astype(jnp.float32)

    vmem = lambda: pl.BlockSpec(memory_space=pltpu.MemorySpace.VMEM)
    logits_flat = pl.pallas_call(
        causal_lm_kernel,
        out_shape=jax.ShapeDtypeStruct((BS, V), jnp.float32),
        in_specs=[vmem() for _ in range(10)],
        out_specs=vmem(),
    )(ids, mask,
      params["emb"], params["pos"], params["wqkv"], params["wo"],
      params["w1"], params["w2"], params["wlm"], params["ln"])
    return logits_flat.reshape(B, S, V)


def forward_reference(input_ids, attention_mask, params):
    """Pure-JAX reference of the same synthetic causal LM (same bf16 casts)."""
    bf16 = jnp.bfloat16
    lnp = params["ln"]

    ids = input_ids.reshape(BS)
    x = jnp.take(params["emb"], ids, axis=0).astype(jnp.float32) + params["pos"]
    if attention_mask is None:
        mask = jnp.ones((B, S), jnp.float32)
    else:
        mask = attention_mask.astype(jnp.float32)

    def ln(h, beta):
        mu = jnp.mean(h, axis=-1, keepdims=True)
        var = jnp.mean((h - mu) ** 2, axis=-1, keepdims=True)
        return (h - mu) * jax.lax.rsqrt(var + LN_EPS) + beta

    h = ln(x, lnp[0:1])
    qkv = jnp.dot(h.astype(bf16), params["wqkv"], preferred_element_type=jnp.float32)
    q = qkv[:, :H].reshape(B, S, H)
    k = qkv[:, H:2 * H].reshape(B, S, H)
    v = qkv[:, 2 * H:].reshape(B, S, H)
    s = jnp.einsum("bqd,bkd->bqk", q.astype(bf16), k.astype(bf16),
                   preferred_element_type=jnp.float32)
    causal = jnp.arange(S)[None, :] <= jnp.arange(S)[:, None]       # (S, S) bool
    keep = causal[None, :, :] & (mask[:, None, :] > 0.5)
    s = jnp.where(keep, s, NEG_INF)
    p = jax.nn.softmax(s, axis=-1)
    a = jnp.einsum("bqk,bkd->bqd", p.astype(bf16), v.astype(bf16),
                   preferred_element_type=jnp.float32)
    attn = jnp.dot(a.reshape(BS, H).astype(bf16), params["wo"],
                   preferred_element_type=jnp.float32)
    x1 = x + attn
    h2 = ln(x1, lnp[1:2])
    mlp = jnp.maximum(jnp.dot(h2.astype(bf16), params["w1"],
                              preferred_element_type=jnp.float32), 0.0)
    mlp = jnp.dot(mlp.astype(bf16), params["w2"], preferred_element_type=jnp.float32)
    x2 = x1 + mlp
    hf = ln(x2, lnp[2:3])
    return jnp.dot(hf.astype(bf16), params["wlm"],
                   preferred_element_type=jnp.float32).reshape(B, S, V)


# TODO(synk): the .generate() loop (multinomial sampling, torch.cat growth) is
# host-side autoregressive control flow and is intentionally not lowered here.

if __name__ == "__main__":
    key = jax.random.PRNGKey(0)
    pkey, ikey = jax.random.split(key)
    params = init_params(pkey)

    input_ids = jax.random.randint(ikey, (B, S), 0, V, dtype=jnp.int32)
    attention_mask = jnp.ones((B, S), jnp.int32).at[1, -2:].set(0)  # pad tail of sample 1

    logits = forward_pallas(input_ids, attention_mask, params)
    jax.block_until_ready(logits)

    ref = forward_reference(input_ids, attention_mask, params)
    assert logits.shape == (B, S, V)
    max_err = jnp.max(jnp.abs(logits - ref))
    assert jnp.allclose(logits, ref, atol=2e-2, rtol=2e-2), (
        f"mismatch vs reference, max abs err = {max_err}")

    print("KERNEL_OK")
</pallas_src>

<mosaic_0001>
module attributes {stable_mosaic.version = 11 : i64} {
  func.func @causal_lm_kernel(%arg0: memref<16x1xi32, #tpu.memory_space<vmem>>, %arg1: memref<1x16xf32, #tpu.memory_space<vmem>>, %arg2: memref<256x128xbf16, #tpu.memory_space<vmem>>, %arg3: memref<16x128xf32, #tpu.memory_space<vmem>>, %arg4: memref<128x384xbf16, #tpu.memory_space<vmem>>, %arg5: memref<128x128xbf16, #tpu.memory_space<vmem>>, %arg6: memref<128x256xbf16, #tpu.memory_space<vmem>>, %arg7: memref<256x128xbf16, #tpu.memory_space<vmem>>, %arg8: memref<128x256xbf16, #tpu.memory_space<vmem>>, %arg9: memref<8x128xf32, #tpu.memory_space<vmem>>, %arg10: memref<16x256xf32, #tpu.memory_space<vmem>>) attributes {dimension_semantics = [], scalar_prefetch = 0 : i64, scratch_operands = 0 : i64, tpu.core_type = #tpu.core_type<tc>} {
    %c0 = arith.constant 0 : index
    %c0_0 = arith.constant 0 : index
    %0 = vector.load %arg9[%c0, %c0_0] : memref<8x128xf32, #tpu.memory_space<vmem>>, vector<8x128xf32>
    %c0_1 = arith.constant 0 : index
    %c0_2 = arith.constant 0 : index
    %1 = vector.load %arg0[%c0_1, %c0_2] : memref<16x1xi32, #tpu.memory_space<vmem>>, vector<16x1xi32>
    %2 = tpu.iota {dimensions = array<i32: 1>} : vector<16x256xi32>
    %3 = vector.broadcast %1 : vector<16x1xi32> to vector<16x256xi32>
    %4 = arith.cmpi eq, %3, %2 : vector<16x256xi32>
    %5 = arith.extui %4 : vector<16x256xi1> to vector<16x256xi32>
    %6 = arith.sitofp %5 : vector<16x256xi32> to vector<16x256xf32>
    %7 = arith.truncf %6 : vector<16x256xf32> to vector<16x256xbf16>
    %c0_3 = arith.constant 0 : index
    %c0_4 = arith.constant 0 : index
    %8 = vector.load %arg2[%c0_3, %c0_4] : memref<256x128xbf16, #tpu.memory_space<vmem>>, vector<256x128xbf16>
    %cst = arith.constant dense<0.000000e+00> : vector<16x128xf32>
    %9 = tpu.matmul %7, %8, %cst {dimension_numbers = #tpu.dot_dimension_numbers<[1], [0], [0], [1], [0, 0, 1, 1], [], []>} : vector<16x256xbf16>, vector<256x128xbf16>, vector<16x128xf32> -> vector<16x128xf32>
    %c0_5 = arith.constant 0 : index
    %c0_6 = arith.constant 0 : index
    %10 = vector.load %arg3[%c0_5, %c0_6] : memref<16x128xf32, #tpu.memory_space<vmem>>, vector<16x128xf32>
    %11 = arith.addf %9, %10 : vector<16x128xf32>
    %12 = vector.extract_strided_slice %0 {offsets = [0, 0], sizes = [1, 128], strides = [1, 1]} : vector<8x128xf32> to vector<1x128xf32>
    %cst_7 = arith.constant dense<0.000000e+00> : vector<16xf32>
    %13 = vector.multi_reduction <add>, %11, %cst_7 [1] : vector<16x128xf32> to vector<16xf32>
    %14 = vector.shape_cast %13 : vector<16xf32> to vector<16x1xf32>
    %cst_8 = arith.constant 1.280000e+02 : f32
    %15 = vector.broadcast %cst_8 : f32 to vector<16x1xf32>
    %16 = arith.divf %14, %15 : vector<16x1xf32>
    %17 = vector.broadcast %16 : vector<16x1xf32> to vector<16x128xf32>
    %18 = arith.subf %11, %17 : vector<16x128xf32>
    %19 = vector.broadcast %16 : vector<16x1xf32> to vector<16x128xf32>
    %20 = arith.subf %11, %19 : vector<16x128xf32>
    %21 = arith.mulf %18, %20 : vector<16x128xf32>
    %cst_9 = arith.constant dense<0.000000e+00> : vector<16xf32>
    %22 = vector.multi_reduction <add>, %21, %cst_9 [1] : vector<16x128xf32> to vector<16xf32>
    %23 = vector.shape_cast %22 : vector<16xf32> to vector<16x1xf32>
    %cst_10 = arith.constant 1.280000e+02 : f32
    %24 = vector.broadcast %cst_10 : f32 to vector<16x1xf32>
    %25 = arith.divf %23, %24 : vector<16x1xf32>
    %26 = vector.broadcast %16 : vector<16x1xf32> to vector<16x128xf32>
    %27 = arith.subf %11, %26 : vector<16x128xf32>
    %cst_11 = arith.constant 9.99999974E-6 : f32
    %28 = vector.broadcast %cst_11 : f32 to vector<16x1xf32>
    %29 = arith.addf %25, %28 : vector<16x1xf32>
    %30 = math.rsqrt %29 : vector<16x1xf32>
    %31 = vector.broadcast %30 : vector<16x1xf32> to vector<16x128xf32>
    %32 = arith.mulf %27, %31 : vector<16x128xf32>
    %33 = vector.broadcast %12 : vector<1x128xf32> to vector<16x128xf32>
    %34 = arith.addf %32, %33 : vector<16x128xf32>
    %35 = arith.truncf %34 : vector<16x128xf32> to vector<16x128xbf16>
    %c0_12 = arith.constant 0 : index
    %c0_13 = arith.constant 0 : index
    %36 = vector.load %arg4[%c0_12, %c0_13] : memref<128x384xbf16, #tpu.memory_space<vmem>>, vector<128x384xbf16>
    %cst_14 = arith.constant dense<0.000000e+00> : vector<16x384xf32>
    %37 = tpu.matmul %35, %36, %cst_14 {dimension_numbers = #tpu.dot_dimension_numbers<[1], [0], [0], [1], [0, 0, 1, 1], [], []>} : vector<16x128xbf16>, vector<128x384xbf16>, vector<16x384xf32> -> vector<16x384xf32>
    %38 = vector.extract_strided_slice %37 {offsets = [0, 0], sizes = [16, 128], strides = [1, 1]} : vector<16x384xf32> to vector<16x128xf32>
    %39 = vector.extract_strided_slice %37 {offsets = [0, 128], sizes = [16, 128], strides = [1, 1]} : vector<16x384xf32> to vector<16x128xf32>
    %40 = vector.extract_strided_slice %37 {offsets = [0, 256], sizes = [16, 128], strides = [1, 1]} : vector<16x384xf32> to vector<16x128xf32>
    %41 = arith.truncf %38 : vector<16x128xf32> to vector<16x128xbf16>
    %42 = arith.truncf %39 : vector<16x128xf32> to vector<16x128xbf16>
    %cst_15 = arith.constant dense<0.000000e+00> : vector<16x16xf32>
    %43 = tpu.matmul %41, %42, %cst_15 {dimension_numbers = #tpu.dot_dimension_numbers<[1], [1], [0], [0], [0, 0, 1, 0], [], []>} : vector<16x128xbf16>, vector<16x128xbf16>, vector<16x16xf32> -> vector<16x16xf32>
    %44 = tpu.iota {dimensions = array<i32: 0>} : vector<16x16xi32>
    %45 = tpu.iota {dimensions = array<i32: 1>} : vector<16x16xi32>
    %c3_i32 = arith.constant 3 : i32
    %46 = vector.broadcast %c3_i32 : i32 to vector<16x16xi32>
    %47 = arith.shrsi %44, %46 : vector<16x16xi32>
    %c3_i32_16 = arith.constant 3 : i32
    %48 = vector.broadcast %c3_i32_16 : i32 to vector<16x16xi32>
    %49 = arith.shrsi %45, %48 : vector<16x16xi32>
    %50 = arith.cmpi eq, %47, %49 : vector<16x16xi32>
    %51 = arith.cmpi sle, %45, %44 : vector<16x16xi32>
    %c0_17 = arith.constant 0 : index
    %c0_18 = arith.constant 0 : index
    %52 = vector.load %arg1[%c0_17, %c0_18] : memref<1x16xf32, #tpu.memory_space<vmem>>, vector<1x16xf32>
    %cst_19 = arith.constant 5.000000e-01 : f32
    %53 = vector.broadcast %cst_19 : f32 to vector<1x16xf32>
    %54 = arith.cmpf ogt, %52, %53 : vector<1x16xf32>
    %55 = arith.andi %50, %51 : vector<16x16xi1>
    %56 = vector.broadcast %54 : vector<1x16xi1> to vector<16x16xi1>
    %57 = arith.andi %55, %56 : vector<16x16xi1>
    %cst_20 = arith.constant -1.000000e+09 : f32
    %58 = vector.broadcast %cst_20 : f32 to vector<16x16xf32>
    %59 = arith.select %57, %43, %58 : vector<16x16xi1>, vector<16x16xf32>
    %cst_21 = arith.constant dense<0xFF800000> : vector<16xf32>
    %60 = vector.multi_reduction <maximumf>, %59, %cst_21 [1] : vector<16x16xf32> to vector<16xf32>
    %61 = vector.shape_cast %60 : vector<16xf32> to vector<16x1xf32>
    %62 = vector.broadcast %61 : vector<16x1xf32> to vector<16x16xf32>
    %63 = arith.subf %59, %62 : vector<16x16xf32>
    %64 = math.exp %63 : vector<16x16xf32>
    %cst_22 = arith.constant dense<0.000000e+00> : vector<16xf32>
    %65 = vector.multi_reduction <add>, %64, %cst_22 [1] : vector<16x16xf32> to vector<16xf32>
    %66 = vector.shape_cast %65 : vector<16xf32> to vector<16x1xf32>
    %67 = tpu.reciprocal %66 {approx = true} : vector<16x1xf32> -> vector<16x1xf32>
    %68 = vector.broadcast %67 : vector<16x1xf32> to vector<16x16xf32>
    %69 = arith.mulf %64, %68 : vector<16x16xf32>
    %70 = arith.truncf %69 : vector<16x16xf32> to vector<16x16xbf16>
    %71 = arith.truncf %40 : vector<16x128xf32> to vector<16x128xbf16>
    %cst_23 = arith.constant dense<0.000000e+00> : vector<16x128xf32>
    %72 = tpu.matmul %70, %71, %cst_23 {dimension_numbers = #tpu.dot_dimension_numbers<[1], [0], [0], [1], [0, 0, 1, 1], [], []>} : vector<16x16xbf16>, vector<16x128xbf16>, vector<16x128xf32> -> vector<16x128xf32>
    %73 = arith.truncf %72 : vector<16x128xf32> to vector<16x128xbf16>
    %c0_24 = arith.constant 0 : index
    %c0_25 = arith.constant 0 : index
    %74 = vector.load %arg5[%c0_24, %c0_25] : memref<128x128xbf16, #tpu.memory_space<vmem>>, vector<128x128xbf16>
    %cst_26 = arith.constant dense<0.000000e+00> : vector<16x128xf32>
    %75 = tpu.matmul %73, %74, %cst_26 {dimension_numbers = #tpu.dot_dimension_numbers<[1], [0], [0], [1], [0, 0, 1, 1], [], []>} : vector<16x128xbf16>, vector<128x128xbf16>, vector<16x128xf32> -> vector<16x128xf32>
    %76 = arith.addf %11, %75 : vector<16x128xf32>
    %77 = vector.extract_strided_slice %0 {offsets = [1, 0], sizes = [1, 128], strides = [1, 1]} : vector<8x128xf32> to vector<1x128xf32>
    %cst_27 = arith.constant dense<0.000000e+00> : vector<16xf32>
    %78 = vector.multi_reduction <add>, %76, %cst_27 [1] : vector<16x128xf32> to vector<16xf32>
    %79 = vector.shape_cast %78 : vector<16xf32> to vector<16x1xf32>
    %cst_28 = arith.constant 1.280000e+02 : f32
    %80 = vector.broadcast %cst_28 : f32 to vector<16x1xf32>
    %81 = arith.divf %79, %80 : vector<16x1xf32>
    %82 = vector.broadcast %81 : vector<16x1xf32> to vector<16x128xf32>
    %83 = arith.subf %76, %82 : vector<16x128xf32>
    %84 = vector.broadcast %81 : vector<16x1xf32> to vector<16x128xf32>
    %85 = arith.subf %76, %84 : vector<16x128xf32>
    %86 = arith.mulf %83, %85 : vector<16x128xf32>
    %cst_29 = arith.constant dense<0.000000e+00> : vector<16xf32>
    %87 = vector.multi_reduction <add>, %86, %cst_29 [1] : vector<16x128xf32> to vector<16xf32>
    %88 = vector.shape_cast %87 : vector<16xf32> to vector<16x1xf32>
    %cst_30 = arith.constant 1.280000e+02 : f32
    %89 = vector.broadcast %cst_30 : f32 to vector<16x1xf32>
    %90 = arith.divf %88, %89 : vector<16x1xf32>
    %91 = vector.broadcast %81 : vector<16x1xf32> to vector<16x128xf32>
    %92 = arith.subf %76, %91 : vector<16x128xf32>
    %cst_31 = arith.constant 9.99999974E-6 : f32
    %93 = vector.broadcast %cst_31 : f32 to vector<16x1xf32>
    %94 = arith.addf %90, %93 : vector<16x1xf32>
    %95 = math.rsqrt %94 : vector<16x1xf32>
    %96 = vector.broadcast %95 : vector<16x1xf32> to vector<16x128xf32>
    %97 = arith.mulf %92, %96 : vector<16x128xf32>
    %98 = vector.broadcast %77 : vector<1x128xf32> to vector<16x128xf32>
    %99 = arith.addf %97, %98 : vector<16x128xf32>
    %100 = arith.truncf %99 : vector<16x128xf32> to vector<16x128xbf16>
    %c0_32 = arith.constant 0 : index
    %c0_33 = arith.constant 0 : index
    %101 = vector.load %arg6[%c0_32, %c0_33] : memref<128x256xbf16, #tpu.memory_space<vmem>>, vector<128x256xbf16>
    %cst_34 = arith.constant dense<0.000000e+00> : vector<16x256xf32>
    %102 = tpu.matmul %100, %101, %cst_34 {dimension_numbers = #tpu.dot_dimension_numbers<[1], [0], [0], [1], [0, 0, 1, 1], [], []>} : vector<16x128xbf16>, vector<128x256xbf16>, vector<16x256xf32> -> vector<16x256xf32>
    %cst_35 = arith.constant 0.000000e+00 : f32
    %103 = vector.broadcast %cst_35 : f32 to vector<16x256xf32>
    %104 = arith.maximumf %102, %103 : vector<16x256xf32>
    %105 = arith.truncf %104 : vector<16x256xf32> to vector<16x256xbf16>
    %c0_36 = arith.constant 0 : index
    %c0_37 = arith.constant 0 : index
    %106 = vector.load %arg7[%c0_36, %c0_37] : memref<256x128xbf16, #tpu.memory_space<vmem>>, vector<256x128xbf16>
    %cst_38 = arith.constant dense<0.000000e+00> : vector<16x128xf32>
    %107 = tpu.matmul %105, %106, %cst_38 {dimension_numbers = #tpu.dot_dimension_numbers<[1], [0], [0], [1], [0, 0, 1, 1], [], []>} : vector<16x256xbf16>, vector<256x128xbf16>, vector<16x128xf32> -> vector<16x128xf32>
    %108 = arith.addf %76, %107 : vector<16x128xf32>
    %109 = vector.extract_strided_slice %0 {offsets = [2, 0], sizes = [1, 128], strides = [1, 1]} : vector<8x128xf32> to vector<1x128xf32>
    %cst_39 = arith.constant dense<0.000000e+00> : vector<16xf32>
    %110 = vector.multi_reduction <add>, %108, %cst_39 [1] : vector<16x128xf32> to vector<16xf32>
    %111 = vector.shape_cast %110 : vector<16xf32> to vector<16x1xf32>
    %cst_40 = arith.constant 1.280000e+02 : f32
    %112 = vector.broadcast %cst_40 : f32 to vector<16x1xf32>
    %113 = arith.divf %111, %112 : vector<16x1xf32>
    %114 = vector.broadcast %113 : vector<16x1xf32> to vector<16x128xf32>
    %115 = arith.subf %108, %114 : vector<16x128xf32>
    %116 = vector.broadcast %113 : vector<16x1xf32> to vector<16x128xf32>
    %117 = arith.subf %108, %116 : vector<16x128xf32>
    %118 = arith.mulf %115, %117 : vector<16x128xf32>
    %cst_41 = arith.constant dense<0.000000e+00> : vector<16xf32>
    %119 = vector.multi_reduction <add>, %118, %cst_41 [1] : vector<16x128xf32> to vector<16xf32>
    %120 = vector.shape_cast %119 : vector<16xf32> to vector<16x1xf32>
    %cst_42 = arith.constant 1.280000e+02 : f32
    %121 = vector.broadcast %cst_42 : f32 to vector<16x1xf32>
    %122 = arith.divf %120, %121 : vector<16x1xf32>
    %123 = vector.broadcast %113 : vector<16x1xf32> to vector<16x128xf32>
    %124 = arith.subf %108, %123 : vector<16x128xf32>
    %cst_43 = arith.constant 9.99999974E-6 : f32
    %125 = vector.broadcast %cst_43 : f32 to vector<16x1xf32>
    %126 = arith.addf %122, %125 : vector<16x1xf32>
    %127 = math.rsqrt %126 : vector<16x1xf32>
    %128 = vector.broadcast %127 : vector<16x1xf32> to vector<16x128xf32>
    %129 = arith.mulf %124, %128 : vector<16x128xf32>
    %130 = vector.broadcast %109 : vector<1x128xf32> to vector<16x128xf32>
    %131 = arith.addf %129, %130 : vector<16x128xf32>
    %132 = arith.truncf %131 : vector<16x128xf32> to vector<16x128xbf16>
    %c0_44 = arith.constant 0 : index
    %c0_45 = arith.constant 0 : index
    %133 = vector.load %arg8[%c0_44, %c0_45] : memref<128x256xbf16, #tpu.memory_space<vmem>>, vector<128x256xbf16>
    %cst_46 = arith.constant dense<0.000000e+00> : vector<16x256xf32>
    %134 = tpu.matmul %132, %133, %cst_46 {dimension_numbers = #tpu.dot_dimension_numbers<[1], [0], [0], [1], [0, 0, 1, 1], [], []>} : vector<16x128xbf16>, vector<128x256xbf16>, vector<16x256xf32> -> vector<16x256xf32>
    %c0_47 = arith.constant 0 : index
    %c0_48 = arith.constant 0 : index
    %135 = vector.load %arg10[%c0_47, %c0_48] : memref<16x256xf32, #tpu.memory_space<vmem>>, vector<16x256xf32>
    tpu.vector_store %arg10[%c0_47, %c0_48], %134 {strides = array<i32>} : memref<16x256xf32, #tpu.memory_space<vmem>>, vector<16x256xf32>,
    return
  }
}

</mosaic_0001>

<llo_original>
// kernel: forward_pallas.1
$region0: #{forward_pallas.1}
  #allocation0 [shape = 'u32[]', space=smem, size = 0x4, offset = 0x4, fixed_abs, tag = 'smem constant byte address 0x4 - core index']
  #allocation1 [shape = 'u32[144,128]{1,0:T(1,128)}', space=vmem, size = 0x12000, scoped, tag = 'internal scratch']
  %s0 = inlined_call_operand.vmem [shape: s32[16,1], index: 0, kind: input, shape index: {}]
  %s1 = inlined_call_operand.vmem [shape: f32[1,16], index: 1, kind: input, shape index: {}]
  %s2 = inlined_call_operand.hbm [shape: bf16[256,128], index: 2, kind: input, shape index: {}]
  %s3 = inlined_call_operand.vmem [shape: f32[16,128], index: 3, kind: input, shape index: {}]
  %s4 = inlined_call_operand.hbm [shape: bf16[128,384], index: 4, kind: input, shape index: {}]
  %s5 = inlined_call_operand.hbm [shape: bf16[128,128], index: 5, kind: input, shape index: {}]
  %s6 = inlined_call_operand.hbm [shape: bf16[128,256], index: 6, kind: input, shape index: {}]
  %s7 = inlined_call_operand.hbm [shape: bf16[256,128], index: 7, kind: input, shape index: {}]
  %s8 = inlined_call_operand.hbm [shape: bf16[128,256], index: 8, kind: input, shape index: {}]
  %s9 = inlined_call_operand.vmem [shape: f32[8,128], index: 9, kind: input, shape index: {}]
  %s10 = inlined_call_operand.hbm [shape: f32[16,256], index: 10, kind: output, shape index: {}]
  %s11 = sld [smem:[#allocation0]]
  $region74: #{forward_pallas.1} parent=0
    _
  %s13 = ssub.s32 1, %s11
  %s14 = scalar_select 0, %s13, %s11
  $region1: #{forward_pallas.1} parent=0
    #allocation2 [shape = 'u8[65536]{0}', space=vmem, size = 0x10000, scoped, tag = 'input window, operand 2, single buffered']
    #allocation3 [shape = 's32[1]{0}', space=sflag, size = 0x4, scoped, tag = 'scoped memory for forward_pallas.1']
    #allocation4 [shape = 's32[1]{0}', space=sflag, size = 0x4, scoped, tag = 'scoped memory for forward_pallas.1']
    #allocation5 [shape = 'u8[98304]{0}', space=vmem, size = 0x18000, scoped, tag = 'input window, operand 4, single buffered']
    #allocation6 [shape = 's32[1]{0}', space=sflag, size = 0x4, scoped, tag = 'scoped memory for forward_pallas.1']
    #allocation7 [shape = 'u8[32768]{0}', space=vmem, size = 0x8000, scoped, tag = 'input window, operand 5, single buffered']
    #allocation8 [shape = 'u8[65536]{0}', space=vmem, size = 0x10000, scoped, tag = 'input window, operand 6, single buffered']
    #allocation9 [shape = 's32[1]{0}', space=sflag, size = 0x4, scoped, tag = 'scoped memory for forward_pallas.1']
    #allocation10 [shape = 'u8[65536]{0}', space=vmem, size = 0x10000, scoped, tag = 'input window, operand 7, single buffered']
    #allocation11 [shape = 'u8[65536]{0}', space=vmem, size = 0x10000, scoped, tag = 'input window, operand 8, single buffered']
    #allocation12 [shape = 's32[1]{0}', space=sflag, size = 0x4, scoped, tag = 'scoped memory for forward_pallas.1']
    #allocation13 [shape = 'u8[16384]{0}', space=vmem, size = 0x4000, scoped, tag = 'output window, operand 0, single buffered']
    %15 = vsyncpa [#allocation3], 0
    %16 = vsyncpa [#allocation6], 0
    %17 = vsyncpa [#allocation9], 0
    %18 = vsyncpa [#allocation12], 0
    %19 = vsyncpa [#allocation4], 0
    // Predicated region
    $region2: #{forward_pallas.1} parent=1 // pred_check
      _
    $region3: #{forward_pallas.1} parent=1 // pred_check_branch
      %21 = sbr.rel (0) target = $region5
    $region4: #{forward_pallas.1} parent=1 // pred_region
      _
    $region5: #{forward_pallas.1} parent=1 // pred_fallthru
      _
    // Predicated region
    $region6: #{forward_pallas.1} parent=1 // pred_check
      _
    $region7: #{forward_pallas.1} parent=1 // pred_check_branch
      %23 = sbr.rel (0) target = $region9
    $region8: #{forward_pallas.1} parent=1 // pred_region
      _
    $region9: #{forward_pallas.1} parent=1 // pred_fallthru
      _
    // Predicated region
    $region10: #{forward_pallas.1} parent=1 // pred_check
      _
    $region11: #{forward_pallas.1} parent=1 // pred_check_branch
      %25 = sbr.rel (0) target = $region13
    $region12: #{forward_pallas.1} parent=1 // pred_region
      %s27 = ssub.s32 2048, 2048
      %28 = vsyncadd [#allocation3], %s27
      %s29 = sshll.u32 [#allocation2], 4
      %s30 = int_to_ptr.vmem [resolvable:$true] %s29
      %35 = dma.hbm_to_vmem [thread:$0]  %s2, 2048, %s30, [#allocation3], 64, 64, 4
    $region13: #{forward_pallas.1} parent=1 // pred_fallthru
      _
    // Predicated region
    $region14: #{forward_pallas.1} parent=1 // pred_check
      _
    $region15: #{forward_pallas.1} parent=1 // pred_check_branch
      %37 = sbr.rel (0) target = $region17
    $region16: #{forward_pallas.1} parent=1 // pred_region
      _
    $region17: #{forward_pallas.1} parent=1 // pred_fallthru
      _
    // Predicated region
    $region18: #{forward_pallas.1} parent=1 // pred_check
      _
    $region19: #{forward_pallas.1} parent=1 // pred_check_branch
      %39 = sbr.rel (0) target = $region21
    $region20: #{forward_pallas.1} parent=1 // pred_region
      %s41 = ssub.s32 3072, 3072
      %42 = vsyncadd [#allocation6], %s41
      %s43 = sshll.u32 [#allocation5], 4
      %s44 = int_to_ptr.vmem [resolvable:$true] %s43
      %49 = dma.hbm_to_vmem [thread:$0]  %s4, 3072, %s44, [#allocation6], 192, 192, 12
    $region21: #{forward_pallas.1} parent=1 // pred_fallthru
      _
    // Predicated region
    $region22: #{forward_pallas.1} parent=1 // pred_check
      _
    $region23: #{forward_pallas.1} parent=1 // pred_check_branch
      %51 = sbr.rel (0) target = $region25
    $region24: #{forward_pallas.1} parent=1 // pred_region
      %s53 = ssub.s32 1024, 1024
      %54 = vsyncadd [#allocation6], %s53
      %s55 = sshll.u32 [#allocation7], 4
      %s56 = int_to_ptr.vmem [resolvable:$true] %s55
      %61 = dma.hbm_to_vmem [thread:$0]  %s5, 1024, %s56, [#allocation6], 64, 64, 4
    $region25: #{forward_pallas.1} parent=1 // pred_fallthru
      _
    // Predicated region
    $region26: #{forward_pallas.1} parent=1 // pred_check
      _
    $region27: #{forward_pallas.1} parent=1 // pred_check_branch
      %63 = sbr.rel (0) target = $region29
    $region28: #{forward_pallas.1} parent=1 // pred_region
      %s65 = ssub.s32 2048, 2048
      %66 = vsyncadd [#allocation9], %s65
      %s67 = sshll.u32 [#allocation8], 4
      %s68 = int_to_ptr.vmem [resolvable:$true] %s67
      %73 = dma.hbm_to_vmem [thread:$0]  %s6, 2048, %s68, [#allocation9], 128, 128, 8
    $region29: #{forward_pallas.1} parent=1 // pred_fallthru
      _
    // Predicated region
    $region30: #{forward_pallas.1} parent=1 // pred_check
      _
    $region31: #{forward_pallas.1} parent=1 // pred_check_branch
      %75 = sbr.rel (0) target = $region33
    $region32: #{forward_pallas.1} parent=1 // pred_region
      %s77 = ssub.s32 2048, 2048
      %78 = vsyncadd [#allocation9], %s77
      %s79 = sshll.u32 [#allocation10], 4
      %s80 = int_to_ptr.vmem [resolvable:$true] %s79
      %85 = dma.hbm_to_vmem [thread:$0]  %s7, 2048, %s80, [#allocation9], 64, 64, 4
    $region33: #{forward_pallas.1} parent=1 // pred_fallthru
      _
    // Predicated region
    $region34: #{forward_pallas.1} parent=1 // pred_check
      _
    $region35: #{forward_pallas.1} parent=1 // pred_check_branch
      %87 = sbr.rel (0) target = $region37
    $region36: #{forward_pallas.1} parent=1 // pred_region
      %s89 = ssub.s32 2048, 2048
      %90 = vsyncadd [#allocation12], %s89
      %s91 = sshll.u32 [#allocation11], 4
      %s92 = int_to_ptr.vmem [resolvable:$true] %s91
      %97 = dma.hbm_to_vmem [thread:$0]  %s8, 2048, %s92, [#allocation12], 128, 128, 8
    $region37: #{forward_pallas.1} parent=1 // pred_fallthru
      _
    // Predicated region
    $region38: #{forward_pallas.1} parent=1 // pred_check
      _
    $region39: #{forward_pallas.1} parent=1 // pred_check_branch
      %99 = sbr.rel (0) target = $region41
    $region40: #{forward_pallas.1} parent=1 // pred_region
      _
    $region41: #{forward_pallas.1} parent=1 // pred_fallthru
      _
    // Predicated region
    $region42: #{forward_pallas.1} parent=1 // pred_check
      _
    $region43: #{forward_pallas.1} parent=1 // pred_check_branch
      %101 = sbr.rel (0) target = $region45
    $region44: #{forward_pallas.1} parent=1 // pred_region
      %102 = dma.done [#allocation3], 2048
    $region45: #{forward_pallas.1} parent=1 // pred_fallthru
      _
    // Predicated region
    $region46: #{forward_pallas.1} parent=1 // pred_check
      _
    $region47: #{forward_pallas.1} parent=1 // pred_check_branch
      %104 = sbr.rel (0) target = $region49
    $region48: #{forward_pallas.1} parent=1 // pred_region
      %105 = dma.done [#allocation6], 3072
    $region49: #{forward_pallas.1} parent=1 // pred_fallthru
      _
    // Predicated region
    $region50: #{forward_pallas.1} parent=1 // pred_check
      _
    $region51: #{forward_pallas.1} parent=1 // pred_check_branch
      %107 = sbr.rel (0) target = $region53
    $region52: #{forward_pallas.1} parent=1 // pred_region
      %108 = dma.done [#allocation6], 1024
    $region53: #{forward_pallas.1} parent=1 // pred_fallthru
      _
    // Predicated region
    $region54: #{forward_pallas.1} parent=1 // pred_check
      _
    $region55: #{forward_pallas.1} parent=1 // pred_check_branch
      %110 = sbr.rel (0) target = $region57
    $region56: #{forward_pallas.1} parent=1 // pred_region
      %111 = dma.done [#allocation9], 2048
    $region57: #{forward_pallas.1} parent=1 // pred_fallthru
      _
    // Predicated region
    $region58: #{forward_pallas.1} parent=1 // pred_check
      _
    $region59: #{forward_pallas.1} parent=1 // pred_check_branch
      %113 = sbr.rel (0) target = $region61
    $region60: #{forward_pallas.1} parent=1 // pred_region
      %114 = dma.done [#allocation9], 2048
    $region61: #{forward_pallas.1} parent=1 // pred_fallthru
      _
    // Predicated region
    $region62: #{forward_pallas.1} parent=1 // pred_check
      _
    $region63: #{forward_pallas.1} parent=1 // pred_check_branch
      %116 = sbr.rel (0) target = $region65
    $region64: #{forward_pallas.1} parent=1 // pred_region
      %117 = dma.done [#allocation12], 2048
    $region65: #{forward_pallas.1} parent=1 // pred_fallthru
      _
    %v119 = vld [vmem:[%s9] sm:$0xff]
    %v120 = vld [vmem:[%s0] sm:$0xff]
    %v121 = vld [vmem:[%s0 + $0x8] sm:$0xff]
    %v122 = vlaneseq
    %v123 = vand.u32 %v122, 127
    %v124 = vadd.s32 %v123, 128
    %125 = vset.pattern.permute.xlu0 0
    %126 = vperm.xlu0 %125, %v120
    %v127 = vpop.permute.xlu0 %126
    %128 = vset.pattern.permute.xlu0 0
    %129 = vperm.xlu0 %128, %v121
    %v130 = vpop.permute.xlu0 %129
    %vm131 = vcmp.eq.s32.totalorder %v127, %v123
    %vm132 = vcmp.eq.s32.totalorder %v127, %v124
    %vm133 = vcmp.eq.s32.totalorder %v130, %v123
    %vm134 = vcmp.eq.s32.totalorder %v130, %v124
    %v135 = vsel %vm131, 1, 0
    %v136 = vsel %vm132, 1, 0
    %v137 = vsel %vm133, 1, 0
    %v138 = vsel %vm134, 1, 0
    %v139 = vcvt.s32.f32 %v135
    %v140 = vcvt.s32.f32 %v136
    %v141 = vcvt.s32.f32 %v137
    %v142 = vcvt.s32.f32 %v138
    %v143 = vpack.c.bf16 %v141, %v139
    %v144 = vpack.c.bf16 %v142, %v140
    %v145 = vld [vmem:[#allocation2] sm:$0xf]
    %v146 = vld [vmem:[#allocation2 + $0x4] sm:$0xf]
    %v147 = vld [vmem:[#allocation2 + $0x8] sm:$0xf]
    %v148 = vld [vmem:[#allocation2 + $0xc] sm:$0xf]
    %v149 = vld [vmem:[#allocation2 + $0x10] sm:$0xf]
    %v150 = vld [vmem:[#allocation2 + $0x14] sm:$0xf]
    %v151 = vld [vmem:[#allocation2 + $0x18] sm:$0xf]
    %v152 = vld [vmem:[#allocation2 + $0x1c] sm:$0xf]
    %v153 = vld [vmem:[#allocation2 + $0x20] sm:$0xf]
    %v154 = vld [vmem:[#allocation2 + $0x24] sm:$0xf]
    %v155 = vld [vmem:[#allocation2 + $0x28] sm:$0xf]
    %v156 = vld [vmem:[#allocation2 + $0x2c] sm:$0xf]
    %v157 = vld [vmem:[#allocation2 + $0x30] sm:$0xf]
    %v158 = vld [vmem:[#allocation2 + $0x34] sm:$0xf]
    %v159 = vld [vmem:[#allocation2 + $0x38] sm:$0xf]
    %v160 = vld [vmem:[#allocation2 + $0x3c] sm:$0xf]
    %v161 = vld [vmem:[#allocation2 + $0x40] sm:$0xf]
    %v162 = vld [vmem:[#allocation2 + $0x44] sm:$0xf]
    %v163 = vld [vmem:[#allocation2 + $0x48] sm:$0xf]
    %v164 = vld [vmem:[#allocation2 + $0x4c] sm:$0xf]
    %v165 = vld [vmem:[#allocation2 + $0x50] sm:$0xf]
    %v166 = vld [vmem:[#allocation2 + $0x54] sm:$0xf]
    %v167 = vld [vmem:[#allocation2 + $0x58] sm:$0xf]
    %v168 = vld [vmem:[#allocation2 + $0x5c] sm:$0xf]
    %v169 = vld [vmem:[#allocation2 + $0x60] sm:$0xf]
    %v170 = vld [vmem:[#allocation2 + $0x64] sm:$0xf]
    %v171 = vld [vmem:[#allocation2 + $0x68] sm:$0xf]
    %v172 = vld [vmem:[#allocation2 + $0x6c] sm:$0xf]
    %v173 = vld [vmem:[#allocation2 + $0x70] sm:$0xf]
    %v174 = vld [vmem:[#allocation2 + $0x74] sm:$0xf]
    %v175 = vld [vmem:[#allocation2 + $0x78] sm:$0xf]
    %v176 = vld [vmem:[#allocation2 + $0x7c] sm:$0xf]
    %v177 = vld [vmem:[%s3] sm:$0xff]
    %v178 = vld [vmem:[%s3 + $0x8] sm:$0xff]
    %v211 = vunpack.c.l.b16 %v145
    %v212 = vunpack.c.l.b16 %v146
    %v213 = vunpack.c.l.b16 %v147
    %v214 = vunpack.c.l.b16 %v148
    %v215 = vunpack.c.l.b16 %v149
    %v216 = vunpack.c.l.b16 %v150
    %v217 = vunpack.c.l.b16 %v151
    %v218 = vunpack.c.l.b16 %v152
    %v219 = vunpack.c.l.b16 %v153
    %v220 = vunpack.c.l.b16 %v154
    %v221 = vunpack.c.l.b16 %v155
    %v222 = vunpack.c.l.b16 %v156
    %v223 = vunpack.c.l.b16 %v157
    %v224 = vunpack.c.l.b16 %v158
    %v225 = vunpack.c.l.b16 %v159
    %v226 = vunpack.c.l.b16 %v160
    %v227 = vunpack.c.l.b16 %v161
    %v228 = vunpack.c.l.b16 %v162
    %v229 = vunpack.c.l.b16 %v163
    %v230 = vunpack.c.l.b16 %v164
    %v231 = vunpack.c.l.b16 %v165
    %v232 = vunpack.c.l.b16 %v166
    %v233 = vunpack.c.l.b16 %v167
    %v234 = vunpack.c.l.b16 %v168
    %v235 = vunpack.c.l.b16 %v169
    %v236 = vunpack.c.l.b16 %v170
    %v237 = vunpack.c.l.b16 %v171
    %v238 = vunpack.c.l.b16 %v172
    %v239 = vunpack.c.l.b16 %v173
    %v240 = vunpack.c.l.b16 %v174
    %v241 = vunpack.c.l.b16 %v175
    %v242 = vunpack.c.l.b16 %v176
    %v243 = vpack.c.b16 %v212, %v211
    %v244 = vpack.c.b16 %v214, %v213
    %v245 = vpack.c.b16 %v216, %v215
    %v246 = vpack.c.b16 %v218, %v217
    %v247 = vpack.c.b16 %v220, %v219
    %v248 = vpack.c.b16 %v222, %v221
    %v249 = vpack.c.b16 %v224, %v223
    %v250 = vpack.c.b16 %v226, %v225
    %v251 = vpack.c.b16 %v228, %v227
    %v252 = vpack.c.b16 %v230, %v229
    %v253 = vpack.c.b16 %v232, %v231
    %v254 = vpack.c.b16 %v234, %v233
    %v255 = vpack.c.b16 %v236, %v235
    %v256 = vpack.c.b16 %v238, %v237
    %v257 = vpack.c.b16 %v240, %v239
    %v258 = vpack.c.b16 %v242, %v241
    %275 = vmatprep.subr.bf16.mxu0 0
    %276 = vmatpush1.bf16.msra.mxu0 %v250
    %277 = vmatprep.subr.bf16.mxu0 0
    %278 = vmatpush1.bf16.msra.mxu0 %v249
    %279 = vmatprep.subr.bf16.mxu0 0
    %280 = vmatpush1.bf16.msra.mxu0 %v248
    %281 = vmatprep.subr.bf16.mxu0 0
    %282 = vmatpush1.bf16.msra.mxu0 %v247
    %283 = vmatprep.subr.bf16.mxu0 0
    %284 = vmatpush1.bf16.msra.mxu0 %v246
    %285 = vmatprep.subr.bf16.mxu0 0
    %286 = vmatpush1.bf16.msra.mxu0 %v245
    %287 = vmatprep.subr.bf16.mxu0 0
    %288 = vmatpush1.bf16.msra.mxu0 %v244
    %289 = vmatprep.subr.bf16.mxu0 0
    %290 = vmatpush1.bf16.msra.mxu0 %v243
    %291 = vmatprep.subr.bf16.mxu0 0
    %292 = vmatpush2.bf16.msra.mxu0 %v258
    %293 = vmatprep.subr.bf16.mxu0 0
    %294 = vmatpush2.bf16.msra.mxu0 %v257
    %295 = vmatprep.subr.bf16.mxu0 0
    %296 = vmatpush2.bf16.msra.mxu0 %v256
    %297 = vmatprep.subr.bf16.mxu0 0
    %298 = vmatpush2.bf16.msra.mxu0 %v255
    %299 = vmatprep.subr.bf16.mxu0 0
    %300 = vmatpush2.bf16.msra.mxu0 %v254
    %301 = vmatprep.subr.bf16.mxu0 0
    %302 = vmatpush2.bf16.msra.mxu0 %v253
    %303 = vmatprep.subr.bf16.mxu0 0
    %304 = vmatpush2.bf16.msra.mxu0 %v252
    %305 = vmatprep.subr.bf16.mxu0 0
    %306 = vmatpush2.bf16.msra.mxu0 %v251
    %307 = vmatprep.mubr.bf16.mxu0 %v144
    %308 = vmatmul.mubr.bf16.gmra.mxu0 %v143
    %v309 = vpop.f32.mrf.mxu0
    %v310 = vadd.f32 %v177, %v309
    %v311 = vpop.f32.mrf.mxu0
    %v312 = vpop.f32.mrf.mxu0
    %v313 = vadd.f32 %v178, %v312
    %v314 = vpop.f32.mrf.mxu0
    %315 = vdwg.mxu0
    %316 = vadd.xlane.f32.xlu0 %v310
    %v317 = vpop.xlane.xlu0 %316
    %318 = vadd.xlane.f32.xlu0 %v313
    %v319 = vpop.xlane.xlu0 %318
    %v320 = vrcp.pop 128.0
    %v321 = vmul.f32 %v317, %v320
    %v322 = vmul.f32 %v319, %v320
    %v323 = vsub.f32 %v310, %v321
    %v324 = vsub.f32 %v313, %v322
    %v325 = vmul.f32 %v323, %v323
    %v326 = vmul.f32 %v324, %v324
    %327 = vadd.xlane.f32.xlu0 %v325
    %v328 = vpop.xlane.xlu0 %327
    %329 = vadd.xlane.f32.xlu0 %v326
    %v330 = vpop.xlane.xlu0 %329
    %v331 = vmul.f32 %v328, %v320
    %v332 = vmul.f32 %v330, %v320
    %v333 = vadd.f32 %v331, 1e-05
    %v334 = vadd.f32 %v332, 1e-05
    %v335 = vrsqrt.pop %v333
    %v336 = vrsqrt.pop %v334
    %v337 = vmul.f32 %v323, %v335
    %v338 = vmul.f32 %v324, %v336
    %v339 = vlaneseq
    %v340 = vshrl.u32 %v339, 7
    %v341 = vsub.s32 0, %v340
    %v342 = vrot.slane %v119, %v341
    %v343 = vadd.f32 %v337, %v342
    %v344 = vadd.f32 %v338, %v342
    %v345 = vpack.c.bf16 %v344, %v343
    %v346 = vld [vmem:[#allocation5] sm:$0xff]
    %v347 = vld [vmem:[#allocation5 + $0x8] sm:$0xf]
    %v348 = vld [vmem:[#allocation5 + $0xc] sm:$0xff]
    %v349 = vld [vmem:[#allocation5 + $0x14] sm:$0xf]
    %v350 = vld [vmem:[#allocation5 + $0x18] sm:$0xff]
    %v351 = vld [vmem:[#allocation5 + $0x20] sm:$0xf]
    %v352 = vld [vmem:[#allocation5 + $0x24] sm:$0xff]
    %v353 = vld [vmem:[#allocation5 + $0x2c] sm:$0xf]
    %v354 = vld [vmem:[#allocation5 + $0x30] sm:$0xff]
    %v355 = vld [vmem:[#allocation5 + $0x38] sm:$0xf]
    %v356 = vld [vmem:[#allocation5 + $0x3c] sm:$0xff]
    %v357 = vld [vmem:[#allocation5 + $0x44] sm:$0xf]
    %v358 = vld [vmem:[#allocation5 + $0x48] sm:$0xff]
    %v359 = vld [vmem:[#allocation5 + $0x50] sm:$0xf]
    %v360 = vld [vmem:[#allocation5 + $0x54] sm:$0xff]
    %v361 = vld [vmem:[#allocation5 + $0x5c] sm:$0xf]
    %v362 = vld [vmem:[#allocation5 + $0x60] sm:$0xff]
    %v363 = vld [vmem:[#allocation5 + $0x68] sm:$0xf]
    %v364 = vld [vmem:[#allocation5 + $0x6c] sm:$0xff]
    %v365 = vld [vmem:[#allocation5 + $0x74] sm:$0xf]
    %v366 = vld [vmem:[#allocation5 + $0x78] sm:$0xff]
    %v367 = vld [vmem:[#allocation5 + $0x80] sm:$0xf]
    %v368 = vld [vmem:[#allocation5 + $0x84] sm:$0xff]
    %v369 = vld [vmem:[#allocation5 + $0x8c] sm:$0xf]
    %v370 = vld [vmem:[#allocation5 + $0x90] sm:$0xff]
    %v371 = vld [vmem:[#allocation5 + $0x98] sm:$0xf]
    %v372 = vld [vmem:[#allocation5 + $0x9c] sm:$0xff]
    %v373 = vld [vmem:[#allocation5 + $0xa4] sm:$0xf]
    %v374 = vld [vmem:[#allocation5 + $0xa8] sm:$0xff]
    %v375 = vld [vmem:[#allocation5 + $0xb0] sm:$0xf]
    %v376 = vld [vmem:[#allocation5 + $0xb4] sm:$0xff]
    %v377 = vld [vmem:[#allocation5 + $0xbc] sm:$0xf]
    %v410 = vunpack.c.l.b16 %v346
    %v411 = vunpack.c.h.b16 %v346
    %v412 = vunpack.c.l.b16 %v347
    %v413 = vunpack.c.l.b16 %v348
    %v414 = vunpack.c.h.b16 %v348
    %v415 = vunpack.c.l.b16 %v349
    %v416 = vunpack.c.l.b16 %v350
    %v417 = vunpack.c.h.b16 %v350
    %v418 = vunpack.c.l.b16 %v351
    %v419 = vunpack.c.l.b16 %v352
    %v420 = vunpack.c.h.b16 %v352
    %v421 = vunpack.c.l.b16 %v353
    %v422 = vunpack.c.l.b16 %v354
    %v423 = vunpack.c.h.b16 %v354
    %v424 = vunpack.c.l.b16 %v355
    %v425 = vunpack.c.l.b16 %v356
    %v426 = vunpack.c.h.b16 %v356
    %v427 = vunpack.c.l.b16 %v357
    %v428 = vunpack.c.l.b16 %v358
    %v429 = vunpack.c.h.b16 %v358
    %v430 = vunpack.c.l.b16 %v359
    %v431 = vunpack.c.l.b16 %v360
    %v432 = vunpack.c.h.b16 %v360
    %v433 = vunpack.c.l.b16 %v361
    %v434 = vunpack.c.l.b16 %v362
    %v435 = vunpack.c.h.b16 %v362
    %v436 = vunpack.c.l.b16 %v363
    %v437 = vunpack.c.l.b16 %v364
    %v438 = vunpack.c.h.b16 %v364
    %v439 = vunpack.c.l.b16 %v365
    %v440 = vunpack.c.l.b16 %v366
    %v441 = vunpack.c.h.b16 %v366
    %v442 = vunpack.c.l.b16 %v367
    %v443 = vunpack.c.l.b16 %v368
    %v444 = vunpack.c.h.b16 %v368
    %v445 = vunpack.c.l.b16 %v369
    %v446 = vunpack.c.l.b16 %v370
    %v447 = vunpack.c.h.b16 %v370
    %v448 = vunpack.c.l.b16 %v371
    %v449 = vunpack.c.l.b16 %v372
    %v450 = vunpack.c.h.b16 %v372
    %v451 = vunpack.c.l.b16 %v373
    %v452 = vunpack.c.l.b16 %v374
    %v453 = vunpack.c.h.b16 %v374
    %v454 = vunpack.c.l.b16 %v375
    %v455 = vunpack.c.l.b16 %v376
    %v456 = vunpack.c.h.b16 %v376
    %v457 = vunpack.c.l.b16 %v377
    %v458 = vpack.c.b16 %v413, %v410
    %v459 = vpack.c.b16 %v414, %v411
    %v460 = vpack.c.b16 %v415, %v412
    %v461 = vpack.c.b16 %v419, %v416
    %v462 = vpack.c.b16 %v420, %v417
    %v463 = vpack.c.b16 %v421, %v418
    %v464 = vpack.c.b16 %v425, %v422
    %v465 = vpack.c.b16 %v426, %v423
    %v466 = vpack.c.b16 %v427, %v424
    %v467 = vpack.c.b16 %v431, %v428
    %v468 = vpack.c.b16 %v432, %v429
    %v469 = vpack.c.b16 %v433, %v430
    %v470 = vpack.c.b16 %v437, %v434
    %v471 = vpack.c.b16 %v438, %v435
    %v472 = vpack.c.b16 %v439, %v436
    %v473 = vpack.c.b16 %v443, %v440
    %v474 = vpack.c.b16 %v444, %v441
    %v475 = vpack.c.b16 %v445, %v442
    %v476 = vpack.c.b16 %v449, %v446
    %v477 = vpack.c.b16 %v450, %v447
    %v478 = vpack.c.b16 %v451, %v448
    %v479 = vpack.c.b16 %v455, %v452
    %v480 = vpack.c.b16 %v456, %v453
    %v481 = vpack.c.b16 %v457, %v454
    %506 = vmatprep.subr.bf16.mxu0 %v480
    %507 = vmatpush1.bf16.msra.mxu0 %v479
    %508 = vmatprep.subr.bf16.mxu0 %v477
    %509 = vmatpush1.bf16.msra.mxu0 %v476
    %510 = vmatprep.subr.bf16.mxu0 %v474
    %511 = vmatpush1.bf16.msra.mxu0 %v473
    %512 = vmatprep.subr.bf16.mxu0 %v471
    %513 = vmatpush1.bf16.msra.mxu0 %v470
    %514 = vmatprep.subr.bf16.mxu0 %v468
    %515 = vmatpush1.bf16.msra.mxu0 %v467
    %516 = vmatprep.subr.bf16.mxu0 %v465
    %517 = vmatpush1.bf16.msra.mxu0 %v464
    %518 = vmatprep.subr.bf16.mxu0 %v462
    %519 = vmatpush1.bf16.msra.mxu0 %v461
    %520 = vmatprep.subr.bf16.mxu0 %v459
    %521 = vmatpush1.bf16.msra.mxu0 %v458
    %522 = vmatprep.subr.bf16.mxu0 0
    %523 = vmatpush2.bf16.msra.mxu0 0
    %524 = vmatprep.subr.bf16.mxu0 0
    %525 = vmatpush2.bf16.msra.mxu0 0
    %526 = vmatprep.subr.bf16.mxu0 0
    %527 = vmatpush2.bf16.msra.mxu0 0
    %528 = vmatprep.subr.bf16.mxu0 0
    %529 = vmatpush2.bf16.msra.mxu0 0
    %530 = vmatprep.subr.bf16.mxu0 0
    %531 = vmatpush2.bf16.msra.mxu0 0
    %532 = vmatprep.subr.bf16.mxu0 0
    %533 = vmatpush2.bf16.msra.mxu0 0
    %534 = vmatprep.subr.bf16.mxu0 0
    %535 = vmatpush2.bf16.msra.mxu0 0
    %536 = vmatprep.subr.bf16.mxu0 0
    %537 = vmatpush2.bf16.msra.mxu0 0
    %538 = vmatprep.mubr.bf16.mxu0 0
    %539 = vmatmul.mubr.bf16.gmra.mxu0 %v345
    %v540 = vpop.f32.mrf.mxu0
    %v541 = vadd.f32 0.0, %v540
    %v542 = vpop.f32.mrf.mxu0
    %v543 = vadd.f32 0.0, %v542
    %v544 = vpop.f32.mrf.mxu0
    %v545 = vadd.f32 0.0, %v544
    %v546 = vpop.f32.mrf.mxu0
    %v547 = vadd.f32 0.0, %v546
    %548 = vdwg.mxu0
    %549 = vmatprep.subr.bf16.mxu0 0
    %550 = vmatpush1.bf16.msra.mxu0 %v481
    %551 = vmatprep.subr.bf16.mxu0 0
    %552 = vmatpush1.bf16.msra.mxu0 %v478
    %553 = vmatprep.subr.bf16.mxu0 0
    %554 = vmatpush1.bf16.msra.mxu0 %v475
    %555 = vmatprep.subr.bf16.mxu0 0
    %556 = vmatpush1.bf16.msra.mxu0 %v472
    %557 = vmatprep.subr.bf16.mxu0 0
    %558 = vmatpush1.bf16.msra.mxu0 %v469
    %559 = vmatprep.subr.bf16.mxu0 0
    %560 = vmatpush1.bf16.msra.mxu0 %v466
    %561 = vmatprep.subr.bf16.mxu0 0
    %562 = vmatpush1.bf16.msra.mxu0 %v463
    %563 = vmatprep.subr.bf16.mxu0 0
    %564 = vmatpush1.bf16.msra.mxu0 %v460
    %565 = vmatprep.subr.bf16.mxu0 0
    %566 = vmatpush2.bf16.msra.mxu0 0
    %567 = vmatprep.subr.bf16.mxu0 0
    %568 = vmatpush2.bf16.msra.mxu0 0
    %569 = vmatprep.subr.bf16.mxu0 0
    %570 = vmatpush2.bf16.msra.mxu0 0
    %571 = vmatprep.subr.bf16.mxu0 0
    %572 = vmatpush2.bf16.msra.mxu0 0
    %573 = vmatprep.subr.bf16.mxu0 0
    %574 = vmatpush2.bf16.msra.mxu0 0
    %575 = vmatprep.subr.bf16.mxu0 0
    %576 = vmatpush2.bf16.msra.mxu0 0
    %577 = vmatprep.subr.bf16.mxu0 0
    %578 = vmatpush2.bf16.msra.mxu0 0
    %579 = vmatprep.subr.bf16.mxu0 0
    %580 = vmatpush2.bf16.msra.mxu0 0
    %581 = vmatprep.mubr.bf16.mxu0 0
    %582 = vmatmul.mubr.bf16.gmra.mxu0 %v345
    %v583 = vpop.f32.mrf.mxu0
    %v584 = vadd.f32 0.0, %v583
    %v585 = vpop.f32.mrf.mxu0
    %v586 = vpop.f32.mrf.mxu0
    %v587 = vadd.f32 0.0, %v586
    %v588 = vpop.f32.mrf.mxu0
    %589 = vdwg.mxu0
    %v590 = vpack.c.bf16 %v545, %v541
    %v591 = vpack.c.bf16 %v547, %v543
    %592 = vmatprep.subr.bf16.mxu0 0
    %593 = vmatpush1.bf16.xpose.msra.mxu0 0
    %594 = vmatprep.subr.bf16.mxu0 0
    %595 = vmatpush1.bf16.xpose.msra.mxu0 0
    %596 = vmatprep.subr.bf16.mxu0 0
    %597 = vmatpush1.bf16.xpose.msra.mxu0 0
    %598 = vmatprep.subr.bf16.mxu0 0
    %599 = vmatpush1.bf16.xpose.msra.mxu0 0
    %600 = vmatprep.subr.bf16.mxu0 0
    %601 = vmatpush1.bf16.xpose.msra.mxu0 0
    %602 = vmatprep.subr.bf16.mxu0 0
    %603 = vmatpush1.bf16.xpose.msra.mxu0 0
    %604 = vmatprep.subr.bf16.mxu0 0
    %605 = vmatpush1.bf16.xpose.msra.mxu0 0
    %606 = vmatprep.subr.bf16.mxu0 0
    %607 = vmatpush1.bf16.xpose.msra.mxu0 %v591
    %608 = vmatprep.subr.bf16.mxu0 0
    %609 = vmatpush2.bf16.xpose.msra.mxu0 0
    %610 = vmatprep.subr.bf16.mxu0 0
    %611 = vmatpush2.bf16.xpose.msra.mxu0 0
    %612 = vmatprep.subr.bf16.mxu0 0
    %613 = vmatpush2.bf16.xpose.msra.mxu0 0
    %614 = vmatprep.subr.bf16.mxu0 0
    %615 = vmatpush2.bf16.xpose.msra.mxu0 0
    %616 = vmatprep.subr.bf16.mxu0 0
    %617 = vmatpush2.bf16.xpose.msra.mxu0 0
    %618 = vmatprep.subr.bf16.mxu0 0
    %619 = vmatpush2.bf16.xpose.msra.mxu0 0
    %620 = vmatprep.subr.bf16.mxu0 0
    %621 = vmatpush2.bf16.xpose.msra.mxu0 0
    %622 = vmatprep.subr.bf16.mxu0 0
    %623 = vmatpush2.bf16.xpose.msra.mxu0 0
    %624 = vmatprep.mubr.bf16.mxu0 0
    %625 = vmatmul.mubr.bf16.gmra.mxu0 %v590
    %v626 = vpop.f32.mrf.mxu0
    %v627 = vadd.f32 0.0, %v626
    %v628 = vpop.f32.mrf.mxu0
    %v629 = vpop.f32.mrf.mxu0
    %v630 = vadd.f32 0.0, %v629
    %v631 = vpop.f32.mrf.mxu0
    %632 = vdwg.mxu0
    %v633 = vlaneseq
    %v634 = vshrl.u32 %v633, 7
    %v635 = vadd.s32 %v634, 8
    %v636 = vshra.s32 %v634, 3
    %v637 = vshra.s32 %v635, 3
    %v638 = vshra.s32 %v123, 3
    %vm639 = vcmp.eq.s32.totalorder %v636, %v638
    %vm640 = vcmp.eq.s32.totalorder %v637, %v638
    %vm641 = vcmp.le.s32.totalorder %v123, %v634
    %vm642 = vcmp.le.s32.totalorder %v123, %v635
    %v643 = vld [vmem:[%s1] sm:$0x1]
    %vm644 = vcmp.gt.f32.partialorder %v643, 0.5
    %vm645 = vmand %vm639, %vm641
    %vm646 = vmand %vm640, %vm642
    %v647 = vsel %vm644, 1, 0
    %v648 = vlaneseq
    %v649 = vshrl.u32 %v648, 7
    %v650 = vsub.s32 0, %v649
    %v651 = vrot.slane %v647, %v650
    %vm652 = vcmp.eq.s32.totalorder %v651, 1
    %vm653 = vmand %vm645, %vm652
    %vm654 = vmand %vm646, %vm652
    %v655 = vsel %vm653, %v627, -1e+09
    %v656 = vsel %vm654, %v630, -1e+09
    %vm657 = vcmask 130048
    %v658 = vsel %vm657, %v655, -inf
    %659 = vmax.xlane.f32.xlu0 %v658
    %v660 = vpop.xlane.xlu0 %659
    %v661 = vsel %vm657, %v656, -inf
    %662 = vmax.xlane.f32.xlu0 %v661
    %v663 = vpop.xlane.xlu0 %662
    %v664 = vsub.f32 %v655, %v660
    %v665 = vsub.f32 %v656, %v663
    %v666 = vmul.f32 %v664, 1.442695
    %v667 = vpow.pop %v666
    %v668 = vmul.f32 %v665, 1.442695
    %v669 = vpow.pop %v668
    %v670 = vsel %vm657, %v667, 0.0
    %671 = vadd.xlane.f32.xlu0 %v670
    %v672 = vpop.xlane.xlu0 %671
    %v673 = vsel %vm657, %v669, 0.0
    %674 = vadd.xlane.f32.xlu0 %v673
    %v675 = vpop.xlane.xlu0 %674
    %v676 = vrcp.pop %v672
    %v677 = vrcp.pop %v675
    %v678 = vmul.f32 %v667, %v676
    %v679 = vmul.f32 %v669, %v677
    %v680 = vpack.c.bf16 %v679, %v678
    %v681 = vpack.c.bf16 %v587, %v584
    %v683 = vsel %vm657, %v680, 0
    %685 = vmatprep.subr.bf16.mxu0 0
    %686 = vmatpush1.bf16.msra.mxu0 0
    %687 = vmatprep.subr.bf16.mxu0 0
    %688 = vmatpush1.bf16.msra.mxu0 0
    %689 = vmatprep.subr.bf16.mxu0 0
    %690 = vmatpush1.bf16.msra.mxu0 0
    %691 = vmatprep.subr.bf16.mxu0 0
    %692 = vmatpush1.bf16.msra.mxu0 0
    %693 = vmatprep.subr.bf16.mxu0 0
    %694 = vmatpush1.bf16.msra.mxu0 0
    %695 = vmatprep.subr.bf16.mxu0 0
    %696 = vmatpush1.bf16.msra.mxu0 0
    %697 = vmatprep.subr.bf16.mxu0 0
    %698 = vmatpush1.bf16.msra.mxu0 0
    %699 = vmatprep.subr.bf16.mxu0 0
    %700 = vmatpush1.bf16.msra.mxu0 %v681
    %701 = vmatprep.subr.bf16.mxu0 0
    %702 = vmatpush2.bf16.msra.mxu0 0
    %703 = vmatprep.subr.bf16.mxu0 0
    %704 = vmatpush2.bf16.msra.mxu0 0
    %705 = vmatprep.subr.bf16.mxu0 0
    %706 = vmatpush2.bf16.msra.mxu0 0
    %707 = vmatprep.subr.bf16.mxu0 0
    %708 = vmatpush2.bf16.msra.mxu0 0
    %709 = vmatprep.subr.bf16.mxu0 0
    %710 = vmatpush2.bf16.msra.mxu0 0
    %711 = vmatprep.subr.bf16.mxu0 0
    %712 = vmatpush2.bf16.msra.mxu0 0
    %713 = vmatprep.subr.bf16.mxu0 0
    %714 = vmatpush2.bf16.msra.mxu0 0
    %715 = vmatprep.subr.bf16.mxu0 0
    %716 = vmatpush2.bf16.msra.mxu0 0
    %717 = vmatprep.mubr.bf16.mxu0 0
    %718 = vmatmul.mubr.bf16.gmra.mxu0 %v683
    %v719 = vpop.f32.mrf.mxu0
    %v720 = vadd.f32 0.0, %v719
    %v721 = vpop.f32.mrf.mxu0
    %v722 = vpop.f32.mrf.mxu0
    %v723 = vadd.f32 0.0, %v722
    %v724 = vpop.f32.mrf.mxu0
    %725 = vdwg.mxu0
    %v726 = vpack.c.bf16 %v723, %v720
    %v727 = vld [vmem:[#allocation7] sm:$0xf]
    %v728 = vld [vmem:[#allocation7 + $0x4] sm:$0xf]
    %v729 = vld [vmem:[#allocation7 + $0x8] sm:$0xf]
    %v730 = vld [vmem:[#allocation7 + $0xc] sm:$0xf]
    %v731 = vld [vmem:[#allocation7 + $0x10] sm:$0xf]
    %v732 = vld [vmem:[#allocation7 + $0x14] sm:$0xf]
    %v733 = vld [vmem:[#allocation7 + $0x18] sm:$0xf]
    %v734 = vld [vmem:[#allocation7 + $0x1c] sm:$0xf]
    %v735 = vld [vmem:[#allocation7 + $0x20] sm:$0xf]
    %v736 = vld [vmem:[#allocation7 + $0x24] sm:$0xf]
    %v737 = vld [vmem:[#allocation7 + $0x28] sm:$0xf]
    %v738 = vld [vmem:[#allocation7 + $0x2c] sm:$0xf]
    %v739 = vld [vmem:[#allocation7 + $0x30] sm:$0xf]
    %v740 = vld [vmem:[#allocation7 + $0x34] sm:$0xf]
    %v741 = vld [vmem:[#allocation7 + $0x38] sm:$0xf]
    %v742 = vld [vmem:[#allocation7 + $0x3c] sm:$0xf]
    %v759 = vunpack.c.l.b16 %v727
    %v760 = vunpack.c.l.b16 %v728
    %v761 = vunpack.c.l.b16 %v729
    %v762 = vunpack.c.l.b16 %v730
    %v763 = vunpack.c.l.b16 %v731
    %v764 = vunpack.c.l.b16 %v732
    %v765 = vunpack.c.l.b16 %v733
    %v766 = vunpack.c.l.b16 %v734
    %v767 = vunpack.c.l.b16 %v735
    %v768 = vunpack.c.l.b16 %v736
    %v769 = vunpack.c.l.b16 %v737
    %v770 = vunpack.c.l.b16 %v738
    %v771 = vunpack.c.l.b16 %v739
    %v772 = vunpack.c.l.b16 %v740
    %v773 = vunpack.c.l.b16 %v741
    %v774 = vunpack.c.l.b16 %v742
    %v775 = vpack.c.b16 %v760, %v759
    %v776 = vpack.c.b16 %v762, %v761
    %v777 = vpack.c.b16 %v764, %v763
    %v778 = vpack.c.b16 %v766, %v765
    %v779 = vpack.c.b16 %v768, %v767
    %v780 = vpack.c.b16 %v770, %v769
    %v781 = vpack.c.b16 %v772, %v771
    %v782 = vpack.c.b16 %v774, %v773
    %791 = vmatprep.subr.bf16.mxu0 0
    %792 = vmatpush1.bf16.msra.mxu0 %v782
    %793 = vmatprep.subr.bf16.mxu0 0
    %794 = vmatpush1.bf16.msra.mxu0 %v781
    %795 = vmatprep.subr.bf16.mxu0 0
    %796 = vmatpush1.bf16.msra.mxu0 %v780
    %797 = vmatprep.subr.bf16.mxu0 0
    %798 = vmatpush1.bf16.msra.mxu0 %v779
    %799 = vmatprep.subr.bf16.mxu0 0
    %800 = vmatpush1.bf16.msra.mxu0 %v778
    %801 = vmatprep.subr.bf16.mxu0 0
    %802 = vmatpush1.bf16.msra.mxu0 %v777
    %803 = vmatprep.subr.bf16.mxu0 0
    %804 = vmatpush1.bf16.msra.mxu0 %v776
    %805 = vmatprep.subr.bf16.mxu0 0
    %806 = vmatpush1.bf16.msra.mxu0 %v775
    %807 = vmatprep.subr.bf16.mxu0 0
    %808 = vmatpush2.bf16.msra.mxu0 0
    %809 = vmatprep.subr.bf16.mxu0 0
    %810 = vmatpush2.bf16.msra.mxu0 0
    %811 = vmatprep.subr.bf16.mxu0 0
    %812 = vmatpush2.bf16.msra.mxu0 0
    %813 = vmatprep.subr.bf16.mxu0 0
    %814 = vmatpush2.bf16.msra.mxu0 0
    %815 = vmatprep.subr.bf16.mxu0 0
    %816 = vmatpush2.bf16.msra.mxu0 0
    %817 = vmatprep.subr.bf16.mxu0 0
    %818 = vmatpush2.bf16.msra.mxu0 0
    %819 = vmatprep.subr.bf16.mxu0 0
    %820 = vmatpush2.bf16.msra.mxu0 0
    %821 = vmatprep.subr.bf16.mxu0 0
    %822 = vmatpush2.bf16.msra.mxu0 0
    %823 = vmatprep.mubr.bf16.mxu0 0
    %824 = vmatmul.mubr.bf16.gmra.mxu0 %v726
    %v825 = vpop.f32.mrf.mxu0
    %v826 = vadd.f32 0.0, %v825
    %v827 = vpop.f32.mrf.mxu0
    %v828 = vpop.f32.mrf.mxu0
    %v829 = vadd.f32 0.0, %v828
    %v830 = vpop.f32.mrf.mxu0
    %831 = vdwg.mxu0
    %v832 = vadd.f32 %v310, %v826
    %v833 = vadd.f32 %v313, %v829
    %834 = vadd.xlane.f32.xlu0 %v832
    %v835 = vpop.xlane.xlu0 %834
    %836 = vadd.xlane.f32.xlu0 %v833
    %v837 = vpop.xlane.xlu0 %836
    %v838 = vmul.f32 %v835, %v320
    %v839 = vmul.f32 %v837, %v320
    %v840 = vsub.f32 %v832, %v838
    %v841 = vsub.f32 %v833, %v839
    %v842 = vmul.f32 %v840, %v840
    %v843 = vmul.f32 %v841, %v841
    %844 = vadd.xlane.f32.xlu0 %v842
    %v845 = vpop.xlane.xlu0 %844
    %846 = vadd.xlane.f32.xlu0 %v843
    %v847 = vpop.xlane.xlu0 %846
    %v848 = vmul.f32 %v845, %v320
    %v849 = vmul.f32 %v847, %v320
    %v850 = vadd.f32 %v848, 1e-05
    %v851 = vadd.f32 %v849, 1e-05
    %v852 = vrsqrt.pop %v850
    %v853 = vrsqrt.pop %v851
    %v854 = vmul.f32 %v840, %v852
    %v855 = vmul.f32 %v841, %v853
    %v856 = vlaneseq
    %v857 = vshrl.u32 %v856, 7
    %v858 = vsub.s32 1, %v857
    %v859 = vrot.slane %v119, %v858
    %v860 = vadd.f32 %v854, %v859
    %v861 = vadd.f32 %v855, %v859
    %v862 = vpack.c.bf16 %v861, %v860
    %v863 = vld [vmem:[#allocation8] sm:$0xff]
    %v864 = vld [vmem:[#allocation8 + $0x8] sm:$0xff]
    %v865 = vld [vmem:[#allocation8 + $0x10] sm:$0xff]
    %v866 = vld [vmem:[#allocation8 + $0x18] sm:$0xff]
    %v867 = vld [vmem:[#allocation8 + $0x20] sm:$0xff]
    %v868 = vld [vmem:[#allocation8 + $0x28] sm:$0xff]
    %v869 = vld [vmem:[#allocation8 + $0x30] sm:$0xff]
    %v870 = vld [vmem:[#allocation8 + $0x38] sm:$0xff]
    %v871 = vld [vmem:[#allocation8 + $0x40] sm:$0xff]
    %v872 = vld [vmem:[#allocation8 + $0x48] sm:$0xff]
    %v873 = vld [vmem:[#allocation8 + $0x50] sm:$0xff]
    %v874 = vld [vmem:[#allocation8 + $0x58] sm:$0xff]
    %v875 = vld [vmem:[#allocation8 + $0x60] sm:$0xff]
    %v876 = vld [vmem:[#allocation8 + $0x68] sm:$0xff]
    %v877 = vld [vmem:[#allocation8 + $0x70] sm:$0xff]
    %v878 = vld [vmem:[#allocation8 + $0x78] sm:$0xff]
    %v895 = vunpack.c.l.b16 %v863
    %v896 = vunpack.c.h.b16 %v863
    %v897 = vunpack.c.l.b16 %v864
    %v898 = vunpack.c.h.b16 %v864
    %v899 = vunpack.c.l.b16 %v865
    %v900 = vunpack.c.h.b16 %v865
    %v901 = vunpack.c.l.b16 %v866
    %v902 = vunpack.c.h.b16 %v866
    %v903 = vunpack.c.l.b16 %v867
    %v904 = vunpack.c.h.b16 %v867
    %v905 = vunpack.c.l.b16 %v868
    %v906 = vunpack.c.h.b16 %v868
    %v907 = vunpack.c.l.b16 %v869
    %v908 = vunpack.c.h.b16 %v869
    %v909 = vunpack.c.l.b16 %v870
    %v910 = vunpack.c.h.b16 %v870
    %v911 = vunpack.c.l.b16 %v871
    %v912 = vunpack.c.h.b16 %v871
    %v913 = vunpack.c.l.b16 %v872
    %v914 = vunpack.c.h.b16 %v872
    %v915 = vunpack.c.l.b16 %v873
    %v916 = vunpack.c.h.b16 %v873
    %v917 = vunpack.c.l.b16 %v874
    %v918 = vunpack.c.h.b16 %v874
    %v919 = vunpack.c.l.b16 %v875
    %v920 = vunpack.c.h.b16 %v875
    %v921 = vunpack.c.l.b16 %v876
    %v922 = vunpack.c.h.b16 %v876
    %v923 = vunpack.c.l.b16 %v877
    %v924 = vunpack.c.h.b16 %v877
    %v925 = vunpack.c.l.b16 %v878
    %v926 = vunpack.c.h.b16 %v878
    %v927 = vpack.c.b16 %v897, %v895
    %v928 = vpack.c.b16 %v898, %v896
    %v929 = vpack.c.b16 %v901, %v899
    %v930 = vpack.c.b16 %v902, %v900
    %v931 = vpack.c.b16 %v905, %v903
    %v932 = vpack.c.b16 %v906, %v904
    %v933 = vpack.c.b16 %v909, %v907
    %v934 = vpack.c.b16 %v910, %v908
    %v935 = vpack.c.b16 %v913, %v911
    %v936 = vpack.c.b16 %v914, %v912
    %v937 = vpack.c.b16 %v917, %v915
    %v938 = vpack.c.b16 %v918, %v916
    %v939 = vpack.c.b16 %v921, %v919
    %v940 = vpack.c.b16 %v922, %v920
    %v941 = vpack.c.b16 %v925, %v923
    %v942 = vpack.c.b16 %v926, %v924
    %959 = vmatprep.subr.bf16.mxu0 %v942
    %960 = vmatpush1.bf16.msra.mxu0 %v941
    %961 = vmatprep.subr.bf16.mxu0 %v940
    %962 = vmatpush1.bf16.msra.mxu0 %v939
    %963 = vmatprep.subr.bf16.mxu0 %v938
    %964 = vmatpush1.bf16.msra.mxu0 %v937
    %965 = vmatprep.subr.bf16.mxu0 %v936
    %966 = vmatpush1.bf16.msra.mxu0 %v935
    %967 = vmatprep.subr.bf16.mxu0 %v934
    %968 = vmatpush1.bf16.msra.mxu0 %v933
    %969 = vmatprep.subr.bf16.mxu0 %v932
    %970 = vmatpush1.bf16.msra.mxu0 %v931
    %971 = vmatprep.subr.bf16.mxu0 %v930
    %972 = vmatpush1.bf16.msra.mxu0 %v929
    %973 = vmatprep.subr.bf16.mxu0 %v928
    %974 = vmatpush1.bf16.msra.mxu0 %v927
    %975 = vmatprep.subr.bf16.mxu0 0
    %976 = vmatpush2.bf16.msra.mxu0 0
    %977 = vmatprep.subr.bf16.mxu0 0
    %978 = vmatpush2.bf16.msra.mxu0 0
    %979 = vmatprep.subr.bf16.mxu0 0
    %980 = vmatpush2.bf16.msra.mxu0 0
    %981 = vmatprep.subr.bf16.mxu0 0
    %982 = vmatpush2.bf16.msra.mxu0 0
    %983 = vmatprep.subr.bf16.mxu0 0
    %984 = vmatpush2.bf16.msra.mxu0 0
    %985 = vmatprep.subr.bf16.mxu0 0
    %986 = vmatpush2.bf16.msra.mxu0 0
    %987 = vmatprep.subr.bf16.mxu0 0
    %988 = vmatpush2.bf16.msra.mxu0 0
    %989 = vmatprep.subr.bf16.mxu0 0
    %990 = vmatpush2.bf16.msra.mxu0 0
    %991 = vmatprep.mubr.bf16.mxu0 0
    %992 = vmatmul.mubr.bf16.gmra.mxu0 %v862
    %v993 = vpop.f32.mrf.mxu0
    %v994 = vadd.f32 0.0, %v993
    %v995 = vpop.f32.mrf.mxu0
    %v996 = vadd.f32 0.0, %v995
    %v997 = vpop.f32.mrf.mxu0
    %v998 = vadd.f32 0.0, %v997
    %v999 = vpop.f32.mrf.mxu0
    %v1000 = vadd.f32 0.0, %v999
    %1001 = vdwg.mxu0
    %v1002 = vmax.f32 %v994, 0.0
    %v1003 = vmax.f32 %v996, 0.0
    %v1004 = vmax.f32 %v998, 0.0
    %v1005 = vmax.f32 %v1000, 0.0
    %v1006 = vpack.c.bf16 %v1004, %v1002
    %v1007 = vpack.c.bf16 %v1005, %v1003
    %v1008 = vld [vmem:[#allocation10] sm:$0xf]
    %v1009 = vld [vmem:[#allocation10 + $0x4] sm:$0xf]
    %v1010 = vld [vmem:[#allocation10 + $0x8] sm:$0xf]
    %v1011 = vld [vmem:[#allocation10 + $0xc] sm:$0xf]
    %v1012 = vld [vmem:[#allocation10 + $0x10] sm:$0xf]
    %v1013 = vld [vmem:[#allocation10 + $0x14] sm:$0xf]
    %v1014 = vld [vmem:[#allocation10 + $0x18] sm:$0xf]
    %v1015 = vld [vmem:[#allocation10 + $0x1c] sm:$0xf]
    %v1016 = vld [vmem:[#allocation10 + $0x20] sm:$0xf]
    %v1017 = vld [vmem:[#allocation10 + $0x24] sm:$0xf]
    %v1018 = vld [vmem:[#allocation10 + $0x28] sm:$0xf]
    %v1019 = vld [vmem:[#allocation10 + $0x2c] sm:$0xf]
    %v1020 = vld [vmem:[#allocation10 + $0x30] sm:$0xf]
    %v1021 = vld [vmem:[#allocation10 + $0x34] sm:$0xf]
    %v1022 = vld [vmem:[#allocation10 + $0x38] sm:$0xf]
    %v1023 = vld [vmem:[#allocation10 + $0x3c] sm:$0xf]
    %v1024 = vld [vmem:[#allocation10 + $0x40] sm:$0xf]
    %v1025 = vld [vmem:[#allocation10 + $0x44] sm:$0xf]
    %v1026 = vld [vmem:[#allocation10 + $0x48] sm:$0xf]
    %v1027 = vld [vmem:[#allocation10 + $0x4c] sm:$0xf]
    %v1028 = vld [vmem:[#allocation10 + $0x50] sm:$0xf]
    %v1029 = vld [vmem:[#allocation10 + $0x54] sm:$0xf]
    %v1030 = vld [vmem:[#allocation10 + $0x58] sm:$0xf]
    %v1031 = vld [vmem:[#allocation10 + $0x5c] sm:$0xf]
    %v1032 = vld [vmem:[#allocation10 + $0x60] sm:$0xf]
    %v1033 = vld [vmem:[#allocation10 + $0x64] sm:$0xf]
    %v1034 = vld [vmem:[#allocation10 + $0x68] sm:$0xf]
    %v1035 = vld [vmem:[#allocation10 + $0x6c] sm:$0xf]
    %v1036 = vld [vmem:[#allocation10 + $0x70] sm:$0xf]
    %v1037 = vld [vmem:[#allocation10 + $0x74] sm:$0xf]
    %v1038 = vld [vmem:[#allocation10 + $0x78] sm:$0xf]
    %v1039 = vld [vmem:[#allocation10 + $0x7c] sm:$0xf]
    %v1072 = vunpack.c.l.b16 %v1008
    %v1073 = vunpack.c.l.b16 %v1009
    %v1074 = vunpack.c.l.b16 %v1010
    %v1075 = vunpack.c.l.b16 %v1011
    %v1076 = vunpack.c.l.b16 %v1012
    %v1077 = vunpack.c.l.b16 %v1013
    %v1078 = vunpack.c.l.b16 %v1014
    %v1079 = vunpack.c.l.b16 %v1015
    %v1080 = vunpack.c.l.b16 %v1016
    %v1081 = vunpack.c.l.b16 %v1017
    %v1082 = vunpack.c.l.b16 %v1018
    %v1083 = vunpack.c.l.b16 %v1019
    %v1084 = vunpack.c.l.b16 %v1020
    %v1085 = vunpack.c.l.b16 %v1021
    %v1086 = vunpack.c.l.b16 %v1022
    %v1087 = vunpack.c.l.b16 %v1023
    %v1088 = vunpack.c.l.b16 %v1024
    %v1089 = vunpack.c.l.b16 %v1025
    %v1090 = vunpack.c.l.b16 %v1026
    %v1091 = vunpack.c.l.b16 %v1027
    %v1092 = vunpack.c.l.b16 %v1028
    %v1093 = vunpack.c.l.b16 %v1029
    %v1094 = vunpack.c.l.b16 %v1030
    %v1095 = vunpack.c.l.b16 %v1031
    %v1096 = vunpack.c.l.b16 %v1032
    %v1097 = vunpack.c.l.b16 %v1033
    %v1098 = vunpack.c.l.b16 %v1034
    %v1099 = vunpack.c.l.b16 %v1035
    %v1100 = vunpack.c.l.b16 %v1036
    %v1101 = vunpack.c.l.b16 %v1037
    %v1102 = vunpack.c.l.b16 %v1038
    %v1103 = vunpack.c.l.b16 %v1039
    %v1104 = vpack.c.b16 %v1073, %v1072
    %v1105 = vpack.c.b16 %v1075, %v1074
    %v1106 = vpack.c.b16 %v1077, %v1076
    %v1107 = vpack.c.b16 %v1079, %v1078
    %v1108 = vpack.c.b16 %v1081, %v1080
    %v1109 = vpack.c.b16 %v1083, %v1082
    %v1110 = vpack.c.b16 %v1085, %v1084
    %v1111 = vpack.c.b16 %v1087, %v1086
    %v1112 = vpack.c.b16 %v1089, %v1088
    %v1113 = vpack.c.b16 %v1091, %v1090
    %v1114 = vpack.c.b16 %v1093, %v1092
    %v1115 = vpack.c.b16 %v1095, %v1094
    %v1116 = vpack.c.b16 %v1097, %v1096
    %v1117 = vpack.c.b16 %v1099, %v1098
    %v1118 = vpack.c.b16 %v1101, %v1100
    %v1119 = vpack.c.b16 %v1103, %v1102
    %1136 = vmatprep.subr.bf16.mxu0 0
    %1137 = vmatpush1.bf16.msra.mxu0 %v1111
    %1138 = vmatprep.subr.bf16.mxu0 0
    %1139 = vmatpush1.bf16.msra.mxu0 %v1110
    %1140 = vmatprep.subr.bf16.mxu0 0
    %1141 = vmatpush1.bf16.msra.mxu0 %v1109
    %1142 = vmatprep.subr.bf16.mxu0 0
    %1143 = vmatpush1.bf16.msra.mxu0 %v1108
    %1144 = vmatprep.subr.bf16.mxu0 0
    %1145 = vmatpush1.bf16.msra.mxu0 %v1107
    %1146 = vmatprep.subr.bf16.mxu0 0
    %1147 = vmatpush1.bf16.msra.mxu0 %v1106
    %1148 = vmatprep.subr.bf16.mxu0 0
    %1149 = vmatpush1.bf16.msra.mxu0 %v1105
    %1150 = vmatprep.subr.bf16.mxu0 0
    %1151 = vmatpush1.bf16.msra.mxu0 %v1104
    %1152 = vmatprep.subr.bf16.mxu0 0
    %1153 = vmatpush2.bf16.msra.mxu0 %v1119
    %1154 = vmatprep.subr.bf16.mxu0 0
    %1155 = vmatpush2.bf16.msra.mxu0 %v1118
    %1156 = vmatprep.subr.bf16.mxu0 0
    %1157 = vmatpush2.bf16.msra.mxu0 %v1117
    %1158 = vmatprep.subr.bf16.mxu0 0
    %1159 = vmatpush2.bf16.msra.mxu0 %v1116
    %1160 = vmatprep.subr.bf16.mxu0 0
    %1161 = vmatpush2.bf16.msra.mxu0 %v1115
    %1162 = vmatprep.subr.bf16.mxu0 0
    %1163 = vmatpush2.bf16.msra.mxu0 %v1114
    %1164 = vmatprep.subr.bf16.mxu0 0
    %1165 = vmatpush2.bf16.msra.mxu0 %v1113
    %1166 = vmatprep.subr.bf16.mxu0 0
    %1167 = vmatpush2.bf16.msra.mxu0 %v1112
    %1168 = vmatprep.mubr.bf16.mxu0 %v1007
    %1169 = vmatmul.mubr.bf16.gmra.mxu0 %v1006
    %v1170 = vpop.f32.mrf.mxu0
    %v1171 = vadd.f32 0.0, %v1170
    %v1172 = vpop.f32.mrf.mxu0
    %v1173 = vpop.f32.mrf.mxu0
    %v1174 = vadd.f32 0.0, %v1173
    %v1175 = vpop.f32.mrf.mxu0
    %1176 = vdwg.mxu0
    %v1177 = vadd.f32 %v832, %v1171
    %v1178 = vadd.f32 %v833, %v1174
    %1179 = vadd.xlane.f32.xlu0 %v1177
    %v1180 = vpop.xlane.xlu0 %1179
    %1181 = vadd.xlane.f32.xlu0 %v1178
    %v1182 = vpop.xlane.xlu0 %1181
    %v1183 = vmul.f32 %v1180, %v320
    %v1184 = vmul.f32 %v1182, %v320
    %v1185 = vsub.f32 %v1177, %v1183
    %v1186 = vsub.f32 %v1178, %v1184
    %v1187 = vmul.f32 %v1185, %v1185
    %v1188 = vmul.f32 %v1186, %v1186
    %1189 = vadd.xlane.f32.xlu0 %v1187
    %v1190 = vpop.xlane.xlu0 %1189
    %1191 = vadd.xlane.f32.xlu0 %v1188
    %v1192 = vpop.xlane.xlu0 %1191
    %v1193 = vmul.f32 %v1190, %v320
    %v1194 = vmul.f32 %v1192, %v320
    %v1195 = vadd.f32 %v1193, 1e-05
    %v1196 = vadd.f32 %v1194, 1e-05
    %v1197 = vrsqrt.pop %v1195
    %v1198 = vrsqrt.pop %v1196
    %v1199 = vmul.f32 %v1185, %v1197
    %v1200 = vmul.f32 %v1186, %v1198
    %v1201 = vlaneseq
    %v1202 = vshrl.u32 %v1201, 7
    %v1203 = vsub.s32 2, %v1202
    %v1204 = vrot.slane %v119, %v1203
    %v1205 = vadd.f32 %v1199, %v1204
    %v1206 = vadd.f32 %v1200, %v1204
    %v1207 = vpack.c.bf16 %v1206, %v1205
    %v1208 = vld [vmem:[#allocation11] sm:$0xff]
    %v1209 = vld [vmem:[#allocation11 + $0x8] sm:$0xff]
    %v1210 = vld [vmem:[#allocation11 + $0x10] sm:$0xff]
    %v1211 = vld [vmem:[#allocation11 + $0x18] sm:$0xff]
    %v1212 = vld [vmem:[#allocation11 + $0x20] sm:$0xff]
    %v1213 = vld [vmem:[#allocation11 + $0x28] sm:$0xff]
    %v1214 = vld [vmem:[#allocation11 + $0x30] sm:$0xff]
    %v1215 = vld [vmem:[#allocation11 + $0x38] sm:$0xff]
    %v1216 = vld [vmem:[#allocation11 + $0x40] sm:$0xff]
    %v1217 = vld [vmem:[#allocation11 + $0x48] sm:$0xff]
    %v1218 = vld [vmem:[#allocation11 + $0x50] sm:$0xff]
    %v1219 = vld [vmem:[#allocation11 + $0x58] sm:$0xff]
    %v1220 = vld [vmem:[#allocation11 + $0x60] sm:$0xff]
    %v1221 = vld [vmem:[#allocation11 + $0x68] sm:$0xff]
    %v1222 = vld [vmem:[#allocation11 + $0x70] sm:$0xff]
    %v1223 = vld [vmem:[#allocation11 + $0x78] sm:$0xff]
    %v1240 = vunpack.c.l.b16 %v1208
    %v1241 = vunpack.c.h.b16 %v1208
    %v1242 = vunpack.c.l.b16 %v1209
    %v1243 = vunpack.c.h.b16 %v1209
    %v1244 = vunpack.c.l.b16 %v1210
    %v1245 = vunpack.c.h.b16 %v1210
    %v1246 = vunpack.c.l.b16 %v1211
    %v1247 = vunpack.c.h.b16 %v1211
    %v1248 = vunpack.c.l.b16 %v1212
    %v1249 = vunpack.c.h.b16 %v1212
    %v1250 = vunpack.c.l.b16 %v1213
    %v1251 = vunpack.c.h.b16 %v1213
    %v1252 = vunpack.c.l.b16 %v1214
    %v1253 = vunpack.c.h.b16 %v1214
    %v1254 = vunpack.c.l.b16 %v1215
    %v1255 = vunpack.c.h.b16 %v1215
    %v1256 = vunpack.c.l.b16 %v1216
    %v1257 = vunpack.c.h.b16 %v1216
    %v1258 = vunpack.c.l.b16 %v1217
    %v1259 = vunpack.c.h.b16 %v1217
    %v1260 = vunpack.c.l.b16 %v1218
    %v1261 = vunpack.c.h.b16 %v1218
    %v1262 = vunpack.c.l.b16 %v1219
    %v1263 = vunpack.c.h.b16 %v1219
    %v1264 = vunpack.c.l.b16 %v1220
    %v1265 = vunpack.c.h.b16 %v1220
    %v1266 = vunpack.c.l.b16 %v1221
    %v1267 = vunpack.c.h.b16 %v1221
    %v1268 = vunpack.c.l.b16 %v1222
    %v1269 = vunpack.c.h.b16 %v1222
    %v1270 = vunpack.c.l.b16 %v1223
    %v1271 = vunpack.c.h.b16 %v1223
    %v1272 = vpack.c.b16 %v1242, %v1240
    %v1273 = vpack.c.b16 %v1243, %v1241
    %v1274 = vpack.c.b16 %v1246, %v1244
    %v1275 = vpack.c.b16 %v1247, %v1245
    %v1276 = vpack.c.b16 %v1250, %v1248
    %v1277 = vpack.c.b16 %v1251, %v1249
    %v1278 = vpack.c.b16 %v1254, %v1252
    %v1279 = vpack.c.b16 %v1255, %v1253
    %v1280 = vpack.c.b16 %v1258, %v1256
    %v1281 = vpack.c.b16 %v1259, %v1257
    %v1282 = vpack.c.b16 %v1262, %v1260
    %v1283 = vpack.c.b16 %v1263, %v1261
    %v1284 = vpack.c.b16 %v1266, %v1264
    %v1285 = vpack.c.b16 %v1267, %v1265
    %v1286 = vpack.c.b16 %v1270, %v1268
    %v1287 = vpack.c.b16 %v1271, %v1269
    %1304 = vmatprep.subr.bf16.mxu0 %v1287
    %1305 = vmatpush1.bf16.msra.mxu0 %v1286
    %1306 = vmatprep.subr.bf16.mxu0 %v1285
    %1307 = vmatpush1.bf16.msra.mxu0 %v1284
    %1308 = vmatprep.subr.bf16.mxu0 %v1283
    %1309 = vmatpush1.bf16.msra.mxu0 %v1282
    %1310 = vmatprep.subr.bf16.mxu0 %v1281
    %1311 = vmatpush1.bf16.msra.mxu0 %v1280
    %1312 = vmatprep.subr.bf16.mxu0 %v1279
    %1313 = vmatpush1.bf16.msra.mxu0 %v1278
    %1314 = vmatprep.subr.bf16.mxu0 %v1277
    %1315 = vmatpush1.bf16.msra.mxu0 %v1276
    %1316 = vmatprep.subr.bf16.mxu0 %v1275
    %1317 = vmatpush1.bf16.msra.mxu0 %v1274
    %1318 = vmatprep.subr.bf16.mxu0 %v1273
    %1319 = vmatpush1.bf16.msra.mxu0 %v1272
    %1320 = vmatprep.subr.bf16.mxu0 0
    %1321 = vmatpush2.bf16.msra.mxu0 0
    %1322 = vmatprep.subr.bf16.mxu0 0
    %1323 = vmatpush2.bf16.msra.mxu0 0
    %1324 = vmatprep.subr.bf16.mxu0 0
    %1325 = vmatpush2.bf16.msra.mxu0 0
    %1326 = vmatprep.subr.bf16.mxu0 0
    %1327 = vmatpush2.bf16.msra.mxu0 0
    %1328 = vmatprep.subr.bf16.mxu0 0
    %1329 = vmatpush2.bf16.msra.mxu0 0
    %1330 = vmatprep.subr.bf16.mxu0 0
    %1331 = vmatpush2.bf16.msra.mxu0 0
    %1332 = vmatprep.subr.bf16.mxu0 0
    %1333 = vmatpush2.bf16.msra.mxu0 0
    %1334 = vmatprep.subr.bf16.mxu0 0
    %1335 = vmatpush2.bf16.msra.mxu0 0
    %1336 = vmatprep.mubr.bf16.mxu0 0
    %1337 = vmatmul.mubr.bf16.gmra.mxu0 %v1207
    %v1338 = vpop.f32.mrf.mxu0
    %v1339 = vadd.f32 0.0, %v1338
    %v1340 = vpop.f32.mrf.mxu0
    %v1341 = vadd.f32 0.0, %v1340
    %v1342 = vpop.f32.mrf.mxu0
    %v1343 = vadd.f32 0.0, %v1342
    %v1344 = vpop.f32.mrf.mxu0
    %v1345 = vadd.f32 0.0, %v1344
    %1346 = vdwg.mxu0
    %1347 = vst [vmem:[#allocation13] sm:$0xff] %v1339
    %1348 = vst [vmem:[#allocation13 + $0x8] sm:$0xff] %v1341
    %1349 = vst [vmem:[#allocation13 + $0x10] sm:$0xff] %v1343
    %1350 = vst [vmem:[#allocation13 + $0x18] sm:$0xff] %v1345
    // Predicated region
    $region66: #{forward_pallas.1} parent=1 // pred_check
      _
    $region67: #{forward_pallas.1} parent=1 // pred_check_branch
      %1352 = sbr.rel (0) target = $region69
    $region68: #{forward_pallas.1} parent=1 // pred_region
      %s1354 = ssub.s32 512, 512
      %1355 = vsyncadd [#allocation4], %s1354
      %s1356 = sshll.u32 [#allocation13], 4
      %s1357 = int_to_ptr.vmem [resolvable:$true] %s1356
      %1362 = dma.vmem_to_hbm [thread:$0]  %s1357, 512, %s10, [#allocation4], 256, 256, 16
    $region69: #{forward_pallas.1} parent=1 // pred_fallthru
      _
    // Predicated region
    $region70: #{forward_pallas.1} parent=1 // pred_check
      _
    $region71: #{forward_pallas.1} parent=1 // pred_check_branch
      %1364 = sbr.rel (0) target = $region73
    $region72: #{forward_pallas.1} parent=1 // pred_region
      %1365 = dma.done [#allocation4], 512
    $region73: #{forward_pallas.1} parent=1 // pred_fallthru
      _
    %1366 = vsyncpa [#allocation3], 1
    %1367 = vsyncpa [#allocation6], 1
    %1368 = vsyncpa [#allocation9], 1
    %1369 = vsyncpa [#allocation12], 1
    %1370 = vsyncpa [#allocation4], 1

</llo_original>
